<compile_context>
chip_gen: v6e
topology: v6e:2x2x1
jax: 0.10.0
libtpu: 0.0.40
codegen_flags: <defaults>
</compile_context>

<pallas_src>
import numpy as np

import jax
import jax.numpy as jnp
from jax.experimental import pallas as pl
from jax.experimental.pallas import tpu as pltpu

ALPHA = 0.5  # triplet margin (config.alpha)


# --------------------------------------------------------------------------
# Single fused kernel:
#   x        : (3N, Cin*H*W)        flattened anchor|pos|neg images (stacked on M)
#   conv_mat : (Cin*H*W, Cout*Ho*Wo) conv folded to a dense matrix (NCHW col order)
#   conv_b   : (1, Cout*Ho*Wo)       per-column conv bias
#   fc_w     : (Cout*Ho*Wo, D)       FC weight, already transposed
#   fc_b     : (1, D)
#   loss     : (1, 1)                mean triplet loss
# --------------------------------------------------------------------------
def fused_triplet_kernel(x_ref, cw_ref, cb_ref, fw_ref, fb_ref, loss_ref):
    x = x_ref[...]                                                     # (3N, CHW)

    # conv (as dense GEMM) + bias + ReLU  -> features in NCHW flatten order
    conv = jnp.dot(x, cw_ref[...], preferred_element_type=jnp.float32)  # (3N, F)
    feat = jnp.maximum(conv + cb_ref[...], 0.0)

    # FC embedding
    emb = jnp.dot(feat, fw_ref[...], preferred_element_type=jnp.float32) + fb_ref[...]

    # split the stacked branches (static row slices)
    n = emb.shape[0] // 3
    ea = emb[0:n]
    ep = emb[n:2 * n]
    en = emb[2 * n:3 * n]

    d_ap = jnp.sum((ea - ep) * (ea - ep), axis=-1, keepdims=True)       # (N, 1)
    d_an = jnp.sum((ea - en) * (ea - en), axis=-1, keepdims=True)       # (N, 1)

    per_sample = jnp.maximum(d_ap - d_an + ALPHA, 0.0)                  # (N, 1)
    loss_ref[...] = jnp.sum(per_sample, axis=0, keepdims=True) * (1.0 / n)


# --------------------------------------------------------------------------
# Host-side, one-time parameter preparation (static layout plumbing):
# fold the 3x3 valid conv into a dense matrix whose columns follow PyTorch's
# NCHW flatten order, so no im2col / transposes are needed anywhere.
# --------------------------------------------------------------------------
def prepare_encoder_params(params, H, W):
    conv_w = np.asarray(params["conv_w"], np.float32)   # (Cout, Cin, k, k)
    conv_b = np.asarray(params["conv_b"], np.float32)   # (Cout,)
    Cout, Cin, k, _ = conv_w.shape
    Ho, Wo = H - k + 1, W - k + 1

    conv_mat = np.zeros((Cin * H * W, Cout * Ho * Wo), np.float32)
    hh, ww = np.meshgrid(np.arange(Ho), np.arange(Wo), indexing="ij")
    out_pos = (hh * Wo + ww).ravel()                     # flat (h, w) output index
    for c in range(Cout):
        for ci in range(Cin):
            for dy in range(k):
                for dx in range(k):
                    rows = (ci * H * W + (hh + dy) * W + (ww + dx)).ravel()
                    conv_mat[rows, c * Ho * Wo + out_pos] = conv_w[c, ci, dy, dx]

    conv_b_flat = np.repeat(conv_b, Ho * Wo)[None, :].astype(np.float32)

    return {
        "conv_mat": jnp.asarray(conv_mat),                       # (CHW, F)
        "conv_b_flat": jnp.asarray(conv_b_flat),                 # (1, F)
        "fc_wT": jnp.asarray(params["fc_w"], jnp.float32).T,     # (F, D)
        "fc_b": jnp.asarray(params["fc_b"], jnp.float32).reshape(1, -1),  # (1, D)
    }


# --------------------------------------------------------------------------
# Forward wrapper: mirrors OnlineTripletSiameseModel.forward(a, p, n)
# --------------------------------------------------------------------------
def triplet_forward(xa, xp, xn, prep):
    N = xa.shape[0]
    # stack branches along M and flatten NCHW -> (3N, Cin*H*W); trivial XLA glue
    x_all = jnp.concatenate([xa, xp, xn], axis=0).reshape(3 * N, -1)

    loss = pl.pallas_call(
        fused_triplet_kernel,
        out_shape=jax.ShapeDtypeStruct((1, 1), jnp.float32),
        in_specs=[pl.BlockSpec(memory_space=pltpu.MemorySpace.VMEM)] * 5,
        out_specs=pl.BlockSpec(memory_space=pltpu.MemorySpace.VMEM),
    )(x_all, prep["conv_mat"], prep["conv_b_flat"], prep["fc_wT"], prep["fc_b"])
    return loss[0, 0]


# --------------------------------------------------------------------------
# Pure-JAX reference (for correctness check)
# --------------------------------------------------------------------------
def reference_forward(xa, xp, xn, params, alpha):
    def enc(x):
        y = jax.lax.conv_general_dilated(
            x, params["conv_w"], (1, 1), "VALID",
            dimension_numbers=("NCHW", "OIHW", "NCHW"))
        y = jnp.maximum(y + params["conv_b"].reshape(1, -1, 1, 1), 0.0)
        y = y.reshape(y.shape[0], -1)
        return y @ params["fc_w"].T + params["fc_b"]

    ea, ep, en = enc(xa), enc(xp), enc(xn)
    d_ap = jnp.sum((ea - ep) ** 2, axis=-1)
    d_an = jnp.sum((ea - en) ** 2, axis=-1)
    return jnp.mean(jnp.maximum(d_ap - d_an + alpha, 0.0))


# --------------------------------------------------------------------------
if __name__ == "__main__":
    key = jax.random.PRNGKey(0)
    kx, kw1, kw2, kb2 = jax.random.split(key, 4)

    N, C, H, W = 2, 1, 16, 16
    Cout, ksz = 8, 3
    Ho, Wo = H - ksz + 1, W - ksz + 1
    F = Cout * Ho * Wo                       # 8 * 14 * 14 = 1568
    D = 32                                   # embedding dim

    # inputs (anchor / positive / negative), NCHW
    xs = jax.random.normal(kx, (3, N, C, H, W), dtype=jnp.float32)
    xa, xp, xn = xs[0], xs[1], xs[2]

    # deterministic parameter init (mirrors init_params: kaiming-normal conv, zero bias)
    fan_in = C * ksz * ksz
    params = {
        "conv_w": jax.random.normal(kw1, (Cout, C, ksz, ksz), jnp.float32)
                  * jnp.sqrt(2.0 / fan_in),
        "conv_b": jnp.zeros((Cout,), jnp.float32),
        "fc_w": jax.random.normal(kw2, (D, F), jnp.float32) * (1.0 / jnp.sqrt(F)),
        "fc_b": jax.random.normal(kb2, (D,), jnp.float32) * 0.01,
    }

    # one-time host-side weight folding (paid once, outside jit)
    prep = prepare_encoder_params(params, H, W)

    loss = jax.jit(triplet_forward)(xa, xp, xn, prep)
    loss = jax.block_until_ready(loss)

    ref = reference_forward(xa, xp, xn, params, ALPHA)
    assert jnp.allclose(loss, ref, rtol=1e-4, atol=1e-4), (loss, ref)

    print("KERNEL_OK")
</pallas_src>

<mosaic_0001>
module attributes {stable_mosaic.version = 11 : i64} {
  func.func @fused_triplet_kernel(%arg0: memref<6x256xf32, #tpu.memory_space<vmem>>, %arg1: memref<256x1568xf32, #tpu.memory_space<vmem>>, %arg2: memref<1x1568xf32, #tpu.memory_space<vmem>>, %arg3: memref<1568x32xf32, #tpu.memory_space<vmem>>, %arg4: memref<1x32xf32, #tpu.memory_space<vmem>>, %arg5: memref<1x1xf32, #tpu.memory_space<vmem>>) attributes {dimension_semantics = [], scalar_prefetch = 0 : i64, scratch_operands = 0 : i64, tpu.core_type = #tpu.core_type<tc>} {
    %c0 = arith.constant 0 : index
    %c0_0 = arith.constant 0 : index
    %0 = vector.load %arg0[%c0, %c0_0] : memref<6x256xf32, #tpu.memory_space<vmem>>, vector<6x256xf32>
    %c0_1 = arith.constant 0 : index
    %c0_2 = arith.constant 0 : index
    %1 = vector.load %arg1[%c0_1, %c0_2] : memref<256x1568xf32, #tpu.memory_space<vmem>>, vector<256x1568xf32>
    %cst = arith.constant dense<0.000000e+00> : vector<6x1568xf32>
    %2 = tpu.matmul %0, %1, %cst {dimension_numbers = #tpu.dot_dimension_numbers<[1], [0], [0], [1], [0, 0, 1, 1], [], []>} : vector<6x256xf32>, vector<256x1568xf32>, vector<6x1568xf32> -> vector<6x1568xf32>
    %c0_3 = arith.constant 0 : index
    %c0_4 = arith.constant 0 : index
    %3 = vector.load %arg2[%c0_3, %c0_4] : memref<1x1568xf32, #tpu.memory_space<vmem>>, vector<1x1568xf32>
    %4 = vector.broadcast %3 : vector<1x1568xf32> to vector<6x1568xf32>
    %5 = arith.addf %2, %4 : vector<6x1568xf32>
    %cst_5 = arith.constant 0.000000e+00 : f32
    %6 = vector.broadcast %cst_5 : f32 to vector<6x1568xf32>
    %7 = arith.maximumf %5, %6 : vector<6x1568xf32>
    %c0_6 = arith.constant 0 : index
    %c0_7 = arith.constant 0 : index
    %8 = vector.load %arg3[%c0_6, %c0_7] : memref<1568x32xf32, #tpu.memory_space<vmem>>, vector<1568x32xf32>
    %cst_8 = arith.constant dense<0.000000e+00> : vector<6x32xf32>
    %9 = tpu.matmul %7, %8, %cst_8 {dimension_numbers = #tpu.dot_dimension_numbers<[1], [0], [0], [1], [0, 0, 1, 1], [], []>} : vector<6x1568xf32>, vector<1568x32xf32>, vector<6x32xf32> -> vector<6x32xf32>
    %c0_9 = arith.constant 0 : index
    %c0_10 = arith.constant 0 : index
    %10 = vector.load %arg4[%c0_9, %c0_10] : memref<1x32xf32, #tpu.memory_space<vmem>>, vector<1x32xf32>
    %11 = vector.broadcast %10 : vector<1x32xf32> to vector<6x32xf32>
    %12 = arith.addf %9, %11 : vector<6x32xf32>
    %13 = vector.extract_strided_slice %12 {offsets = [0, 0], sizes = [2, 32], strides = [1, 1]} : vector<6x32xf32> to vector<2x32xf32>
    %14 = vector.extract_strided_slice %12 {offsets = [2, 0], sizes = [2, 32], strides = [1, 1]} : vector<6x32xf32> to vector<2x32xf32>
    %15 = vector.extract_strided_slice %12 {offsets = [4, 0], sizes = [2, 32], strides = [1, 1]} : vector<6x32xf32> to vector<2x32xf32>
    %16 = arith.subf %13, %14 : vector<2x32xf32>
    %17 = arith.subf %13, %14 : vector<2x32xf32>
    %18 = arith.mulf %16, %17 : vector<2x32xf32>
    %cst_11 = arith.constant dense<0.000000e+00> : vector<2xf32>
    %19 = vector.multi_reduction <add>, %18, %cst_11 [1] : vector<2x32xf32> to vector<2xf32>
    %20 = vector.shape_cast %19 : vector<2xf32> to vector<2x1xf32>
    %21 = arith.subf %13, %15 : vector<2x32xf32>
    %22 = arith.subf %13, %15 : vector<2x32xf32>
    %23 = arith.mulf %21, %22 : vector<2x32xf32>
    %cst_12 = arith.constant dense<0.000000e+00> : vector<2xf32>
    %24 = vector.multi_reduction <add>, %23, %cst_12 [1] : vector<2x32xf32> to vector<2xf32>
    %25 = vector.shape_cast %24 : vector<2xf32> to vector<2x1xf32>
    %26 = arith.subf %20, %25 : vector<2x1xf32>
    %cst_13 = arith.constant 5.000000e-01 : f32
    %27 = vector.broadcast %cst_13 : f32 to vector<2x1xf32>
    %28 = arith.addf %26, %27 : vector<2x1xf32>
    %cst_14 = arith.constant 0.000000e+00 : f32
    %29 = vector.broadcast %cst_14 : f32 to vector<2x1xf32>
    %30 = arith.maximumf %28, %29 : vector<2x1xf32>
    %cst_15 = arith.constant dense<0.000000e+00> : vector<1xf32>
    %31 = vector.multi_reduction <add>, %30, %cst_15 [0] : vector<2x1xf32> to vector<1xf32>
    %32 = vector.shape_cast %31 : vector<1xf32> to vector<1x1xf32>
    %cst_16 = arith.constant 5.000000e-01 : f32
    %33 = vector.broadcast %cst_16 : f32 to vector<1x1xf32>
    %34 = arith.mulf %32, %33 : vector<1x1xf32>
    %c0_17 = arith.constant 0 : index
    %c0_18 = arith.constant 0 : index
    %35 = vector.load %arg5[%c0_17, %c0_18] : memref<1x1xf32, #tpu.memory_space<vmem>>, vector<1x1xf32>
    tpu.vector_store %arg5[%c0_17, %c0_18], %34 {strides = array<i32>} : memref<1x1xf32, #tpu.memory_space<vmem>>, vector<1x1xf32>,
    return
  }
}

</mosaic_0001>

<llo_original>
// kernel: triplet_forward.1
$region0: #{triplet_forward.1}
  #allocation0 [shape = 'u32[]', space=smem, size = 0x4, offset = 0x4, fixed_abs, tag = 'smem constant byte address 0x4 - core index']
  #allocation1 [shape = 'u32[144,128]{1,0:T(1,128)}', space=vmem, size = 0x12000, scoped, tag = 'internal scratch']
  %s0 = inlined_call_operand.vmem [shape: f32[6,256], index: 0, kind: input, shape index: {}]
  %s1 = inlined_call_operand.vmem [shape: f32[256,1568], index: 1, kind: input, shape index: {}]
  %s2 = inlined_call_operand.vmem [shape: f32[1,1568], index: 2, kind: input, shape index: {}]
  %s3 = inlined_call_operand.vmem [shape: f32[1568,32], index: 3, kind: input, shape index: {}]
  %s4 = inlined_call_operand.vmem [shape: f32[1,32], index: 4, kind: input, shape index: {}]
  %s5 = inlined_call_operand.hbm [shape: f32[1,1], index: 5, kind: output, shape index: {}]
  %s6 = sld [smem:[#allocation0]]
  $region30: #{triplet_forward.1} parent=0
    _
  %s8 = ssub.s32 1, %s6
  %s9 = scalar_select 0, %s8, %s6
  $region1: #{triplet_forward.1} parent=0
    #allocation2 [shape = 'u8[512]{0}', space=vmem, size = 0x400, scoped, tag = 'output window, operand 0, single buffered']
    #allocation3 [shape = 's32[1]{0}', space=sflag, size = 0x4, scoped, tag = 'scoped memory for triplet_forward.1']
    %10 = vsyncpa [#allocation3], 0
    // Predicated region
    $region2: #{triplet_forward.1} parent=1 // pred_check
      _
    $region3: #{triplet_forward.1} parent=1 // pred_check_branch
      %12 = sbr.rel (0) target = $region5
    $region4: #{triplet_forward.1} parent=1 // pred_region
      _
    $region5: #{triplet_forward.1} parent=1 // pred_fallthru
      _
    // Predicated region
    $region6: #{triplet_forward.1} parent=1 // pred_check
      _
    $region7: #{triplet_forward.1} parent=1 // pred_check_branch
      %14 = sbr.rel (0) target = $region9
    $region8: #{triplet_forward.1} parent=1 // pred_region
      _
    $region9: #{triplet_forward.1} parent=1 // pred_fallthru
      _
    // Predicated region
    $region10: #{triplet_forward.1} parent=1 // pred_check
      _
    $region11: #{triplet_forward.1} parent=1 // pred_check_branch
      %16 = sbr.rel (0) target = $region13
    $region12: #{triplet_forward.1} parent=1 // pred_region
      _
    $region13: #{triplet_forward.1} parent=1 // pred_fallthru
      _
    // Predicated region
    $region14: #{triplet_forward.1} parent=1 // pred_check
      _
    $region15: #{triplet_forward.1} parent=1 // pred_check_branch
      %18 = sbr.rel (0) target = $region17
    $region16: #{triplet_forward.1} parent=1 // pred_region
      _
    $region17: #{triplet_forward.1} parent=1 // pred_fallthru
      _
    // Predicated region
    $region18: #{triplet_forward.1} parent=1 // pred_check
      _
    $region19: #{triplet_forward.1} parent=1 // pred_check_branch
      %20 = sbr.rel (0) target = $region21
    $region20: #{triplet_forward.1} parent=1 // pred_region
      _
    $region21: #{triplet_forward.1} parent=1 // pred_fallthru
      _
    %v21 = vld [vmem:[%s0] sm:$0x3f]
    %v22 = vld [vmem:[%s0 + $0x8] sm:$0x3f]
    %v23 = vld [vmem:[%s1] sm:$0xff]
    %v24 = vld [vmem:[%s1 + $0x8] sm:$0xff]
    %v25 = vld [vmem:[%s1 + $0x10] sm:$0xff]
    %v26 = vld [vmem:[%s1 + $0x18] sm:$0xff]
    %v27 = vld [vmem:[%s1 + $0x20] sm:$0xff]
    %v28 = vld [vmem:[%s1 + $0x28] sm:$0xff]
    %v29 = vld [vmem:[%s1 + $0x30] sm:$0xff]
    %v30 = vld [vmem:[%s1 + $0x38] sm:$0xff]
    %v31 = vld [vmem:[%s1 + $0x40] sm:$0xff]
    %v32 = vld [vmem:[%s1 + $0x48] sm:$0xff]
    %v33 = vld [vmem:[%s1 + $0x50] sm:$0xff]
    %v34 = vld [vmem:[%s1 + $0x58] sm:$0xff]
    %v35 = vld [vmem:[%s1 + $0x60] sm:$0xff]
    %v36 = vld [vmem:[%s1 + $0x68] sm:$0xff]
    %v37 = vld [vmem:[%s1 + $0x70] sm:$0xff]
    %v38 = vld [vmem:[%s1 + $0x78] sm:$0xff]
    %v39 = vld [vmem:[%s1 + $0x80] sm:$0xff]
    %v40 = vld [vmem:[%s1 + $0x88] sm:$0xff]
    %v41 = vld [vmem:[%s1 + $0x90] sm:$0xff]
    %v42 = vld [vmem:[%s1 + $0x98] sm:$0xff]
    %v43 = vld [vmem:[%s1 + $0xa0] sm:$0xff]
    %v44 = vld [vmem:[%s1 + $0xa8] sm:$0xff]
    %v45 = vld [vmem:[%s1 + $0xb0] sm:$0xff]
    %v46 = vld [vmem:[%s1 + $0xb8] sm:$0xff]
    %v47 = vld [vmem:[%s1 + $0xc0] sm:$0xff]
    %v48 = vld [vmem:[%s1 + $0xc8] sm:$0xff]
    %v49 = vld [vmem:[%s1 + $0xd0] sm:$0xff]
    %v50 = vld [vmem:[%s1 + $0xd8] sm:$0xff]
    %v51 = vld [vmem:[%s1 + $0xe0] sm:$0xff]
    %v52 = vld [vmem:[%s1 + $0xe8] sm:$0xff]
    %v53 = vld [vmem:[%s1 + $0xf0] sm:$0xff]
    %v54 = vld [vmem:[%s1 + $0xf8] sm:$0xff]
    %v55 = vld [vmem:[%s1 + $0x100] sm:$0xff]
    %v56 = vld [vmem:[%s1 + $0x108] sm:$0xff]
    %v57 = vld [vmem:[%s1 + $0x110] sm:$0xff]
    %v58 = vld [vmem:[%s1 + $0x118] sm:$0xff]
    %v59 = vld [vmem:[%s1 + $0x120] sm:$0xff]
    %v60 = vld [vmem:[%s1 + $0x128] sm:$0xff]
    %v61 = vld [vmem:[%s1 + $0x130] sm:$0xff]
    %v62 = vld [vmem:[%s1 + $0x138] sm:$0xff]
    %v63 = vld [vmem:[%s1 + $0x140] sm:$0xff]
    %v64 = vld [vmem:[%s1 + $0x148] sm:$0xff]
    %v65 = vld [vmem:[%s1 + $0x150] sm:$0xff]
    %v66 = vld [vmem:[%s1 + $0x158] sm:$0xff]
    %v67 = vld [vmem:[%s1 + $0x160] sm:$0xff]
    %v68 = vld [vmem:[%s1 + $0x168] sm:$0xff]
    %v69 = vld [vmem:[%s1 + $0x170] sm:$0xff]
    %v70 = vld [vmem:[%s1 + $0x178] sm:$0xff]
    %v71 = vld [vmem:[%s1 + $0x180] sm:$0xff]
    %v72 = vld [vmem:[%s1 + $0x188] sm:$0xff]
    %v73 = vld [vmem:[%s1 + $0x190] sm:$0xff]
    %v74 = vld [vmem:[%s1 + $0x198] sm:$0xff]
    %v75 = vld [vmem:[%s1 + $0x1a0] sm:$0xff]
    %v76 = vld [vmem:[%s1 + $0x1a8] sm:$0xff]
    %v77 = vld [vmem:[%s1 + $0x1b0] sm:$0xff]
    %v78 = vld [vmem:[%s1 + $0x1b8] sm:$0xff]
    %v79 = vld [vmem:[%s1 + $0x1c0] sm:$0xff]
    %v80 = vld [vmem:[%s1 + $0x1c8] sm:$0xff]
    %v81 = vld [vmem:[%s1 + $0x1d0] sm:$0xff]
    %v82 = vld [vmem:[%s1 + $0x1d8] sm:$0xff]
    %v83 = vld [vmem:[%s1 + $0x1e0] sm:$0xff]
    %v84 = vld [vmem:[%s1 + $0x1e8] sm:$0xff]
    %v85 = vld [vmem:[%s1 + $0x1f0] sm:$0xff]
    %v86 = vld [vmem:[%s1 + $0x1f8] sm:$0xff]
    %v87 = vld [vmem:[%s1 + $0x200] sm:$0xff]
    %v88 = vld [vmem:[%s1 + $0x208] sm:$0xff]
    %v89 = vld [vmem:[%s1 + $0x210] sm:$0xff]
    %v90 = vld [vmem:[%s1 + $0x218] sm:$0xff]
    %v91 = vld [vmem:[%s1 + $0x220] sm:$0xff]
    %v92 = vld [vmem:[%s1 + $0x228] sm:$0xff]
    %v93 = vld [vmem:[%s1 + $0x230] sm:$0xff]
    %v94 = vld [vmem:[%s1 + $0x238] sm:$0xff]
    %v95 = vld [vmem:[%s1 + $0x240] sm:$0xff]
    %v96 = vld [vmem:[%s1 + $0x248] sm:$0xff]
    %v97 = vld [vmem:[%s1 + $0x250] sm:$0xff]
    %v98 = vld [vmem:[%s1 + $0x258] sm:$0xff]
    %v99 = vld [vmem:[%s1 + $0x260] sm:$0xff]
    %v100 = vld [vmem:[%s1 + $0x268] sm:$0xff]
    %v101 = vld [vmem:[%s1 + $0x270] sm:$0xff]
    %v102 = vld [vmem:[%s1 + $0x278] sm:$0xff]
    %v103 = vld [vmem:[%s1 + $0x280] sm:$0xff]
    %v104 = vld [vmem:[%s1 + $0x288] sm:$0xff]
    %v105 = vld [vmem:[%s1 + $0x290] sm:$0xff]
    %v106 = vld [vmem:[%s1 + $0x298] sm:$0xff]
    %v107 = vld [vmem:[%s1 + $0x2a0] sm:$0xff]
    %v108 = vld [vmem:[%s1 + $0x2a8] sm:$0xff]
    %v109 = vld [vmem:[%s1 + $0x2b0] sm:$0xff]
    %v110 = vld [vmem:[%s1 + $0x2b8] sm:$0xff]
    %v111 = vld [vmem:[%s1 + $0x2c0] sm:$0xff]
    %v112 = vld [vmem:[%s1 + $0x2c8] sm:$0xff]
    %v113 = vld [vmem:[%s1 + $0x2d0] sm:$0xff]
    %v114 = vld [vmem:[%s1 + $0x2d8] sm:$0xff]
    %v115 = vld [vmem:[%s1 + $0x2e0] sm:$0xff]
    %v116 = vld [vmem:[%s1 + $0x2e8] sm:$0xff]
    %v117 = vld [vmem:[%s1 + $0x2f0] sm:$0xff]
    %v118 = vld [vmem:[%s1 + $0x2f8] sm:$0xff]
    %v119 = vld [vmem:[%s1 + $0x300] sm:$0xff]
    %v120 = vld [vmem:[%s1 + $0x308] sm:$0xff]
    %v121 = vld [vmem:[%s1 + $0x310] sm:$0xff]
    %v122 = vld [vmem:[%s1 + $0x318] sm:$0xff]
    %v123 = vld [vmem:[%s1 + $0x320] sm:$0xff]
    %v124 = vld [vmem:[%s1 + $0x328] sm:$0xff]
    %v125 = vld [vmem:[%s1 + $0x330] sm:$0xff]
    %v126 = vld [vmem:[%s1 + $0x338] sm:$0xff]
    %v127 = vld [vmem:[%s1 + $0x340] sm:$0xff]
    %v128 = vld [vmem:[%s1 + $0x348] sm:$0xff]
    %v129 = vld [vmem:[%s1 + $0x350] sm:$0xff]
    %v130 = vld [vmem:[%s1 + $0x358] sm:$0xff]
    %v131 = vld [vmem:[%s1 + $0x360] sm:$0xff]
    %v132 = vld [vmem:[%s1 + $0x368] sm:$0xff]
    %v133 = vld [vmem:[%s1 + $0x370] sm:$0xff]
    %v134 = vld [vmem:[%s1 + $0x378] sm:$0xff]
    %v135 = vld [vmem:[%s1 + $0x380] sm:$0xff]
    %v136 = vld [vmem:[%s1 + $0x388] sm:$0xff]
    %v137 = vld [vmem:[%s1 + $0x390] sm:$0xff]
    %v138 = vld [vmem:[%s1 + $0x398] sm:$0xff]
    %v139 = vld [vmem:[%s1 + $0x3a0] sm:$0xff]
    %v140 = vld [vmem:[%s1 + $0x3a8] sm:$0xff]
    %v141 = vld [vmem:[%s1 + $0x3b0] sm:$0xff]
    %v142 = vld [vmem:[%s1 + $0x3b8] sm:$0xff]
    %v143 = vld [vmem:[%s1 + $0x3c0] sm:$0xff]
    %v144 = vld [vmem:[%s1 + $0x3c8] sm:$0xff]
    %v145 = vld [vmem:[%s1 + $0x3d0] sm:$0xff]
    %v146 = vld [vmem:[%s1 + $0x3d8] sm:$0xff]
    %v147 = vld [vmem:[%s1 + $0x3e0] sm:$0xff]
    %v148 = vld [vmem:[%s1 + $0x3e8] sm:$0xff]
    %v149 = vld [vmem:[%s1 + $0x3f0] sm:$0xff]
    %v150 = vld [vmem:[%s1 + $0x3f8] sm:$0xff]
    %v151 = vld [vmem:[%s1 + $0x400] sm:$0xff]
    %v152 = vld [vmem:[%s1 + $0x408] sm:$0xff]
    %v153 = vld [vmem:[%s1 + $0x410] sm:$0xff]
    %v154 = vld [vmem:[%s1 + $0x418] sm:$0xff]
    %v155 = vld [vmem:[%s1 + $0x420] sm:$0xff]
    %v156 = vld [vmem:[%s1 + $0x428] sm:$0xff]
    %v157 = vld [vmem:[%s1 + $0x430] sm:$0xff]
    %v158 = vld [vmem:[%s1 + $0x438] sm:$0xff]
    %v159 = vld [vmem:[%s1 + $0x440] sm:$0xff]
    %v160 = vld [vmem:[%s1 + $0x448] sm:$0xff]
    %v161 = vld [vmem:[%s1 + $0x450] sm:$0xff]
    %v162 = vld [vmem:[%s1 + $0x458] sm:$0xff]
    %v163 = vld [vmem:[%s1 + $0x460] sm:$0xff]
    %v164 = vld [vmem:[%s1 + $0x468] sm:$0xff]
    %v165 = vld [vmem:[%s1 + $0x470] sm:$0xff]
    %v166 = vld [vmem:[%s1 + $0x478] sm:$0xff]
    %v167 = vld [vmem:[%s1 + $0x480] sm:$0xff]
    %v168 = vld [vmem:[%s1 + $0x488] sm:$0xff]
    %v169 = vld [vmem:[%s1 + $0x490] sm:$0xff]
    %v170 = vld [vmem:[%s1 + $0x498] sm:$0xff]
    %v171 = vld [vmem:[%s1 + $0x4a0] sm:$0xff]
    %v172 = vld [vmem:[%s1 + $0x4a8] sm:$0xff]
    %v173 = vld [vmem:[%s1 + $0x4b0] sm:$0xff]
    %v174 = vld [vmem:[%s1 + $0x4b8] sm:$0xff]
    %v175 = vld [vmem:[%s1 + $0x4c0] sm:$0xff]
    %v176 = vld [vmem:[%s1 + $0x4c8] sm:$0xff]
    %v177 = vld [vmem:[%s1 + $0x4d0] sm:$0xff]
    %v178 = vld [vmem:[%s1 + $0x4d8] sm:$0xff]
    %v179 = vld [vmem:[%s1 + $0x4e0] sm:$0xff]
    %v180 = vld [vmem:[%s1 + $0x4e8] sm:$0xff]
    %v181 = vld [vmem:[%s1 + $0x4f0] sm:$0xff]
    %v182 = vld [vmem:[%s1 + $0x4f8] sm:$0xff]
    %v183 = vld [vmem:[%s1 + $0x500] sm:$0xff]
    %v184 = vld [vmem:[%s1 + $0x508] sm:$0xff]
    %v185 = vld [vmem:[%s1 + $0x510] sm:$0xff]
    %v186 = vld [vmem:[%s1 + $0x518] sm:$0xff]
    %v187 = vld [vmem:[%s1 + $0x520] sm:$0xff]
    %v188 = vld [vmem:[%s1 + $0x528] sm:$0xff]
    %v189 = vld [vmem:[%s1 + $0x530] sm:$0xff]
    %v190 = vld [vmem:[%s1 + $0x538] sm:$0xff]
    %v191 = vld [vmem:[%s1 + $0x540] sm:$0xff]
    %v192 = vld [vmem:[%s1 + $0x548] sm:$0xff]
    %v193 = vld [vmem:[%s1 + $0x550] sm:$0xff]
    %v194 = vld [vmem:[%s1 + $0x558] sm:$0xff]
    %v195 = vld [vmem:[%s1 + $0x560] sm:$0xff]
    %v196 = vld [vmem:[%s1 + $0x568] sm:$0xff]
    %v197 = vld [vmem:[%s1 + $0x570] sm:$0xff]
    %v198 = vld [vmem:[%s1 + $0x578] sm:$0xff]
    %v199 = vld [vmem:[%s1 + $0x580] sm:$0xff]
    %v200 = vld [vmem:[%s1 + $0x588] sm:$0xff]
    %v201 = vld [vmem:[%s1 + $0x590] sm:$0xff]
    %v202 = vld [vmem:[%s1 + $0x598] sm:$0xff]
    %v203 = vld [vmem:[%s1 + $0x5a0] sm:$0xff]
    %v204 = vld [vmem:[%s1 + $0x5a8] sm:$0xff]
    %v205 = vld [vmem:[%s1 + $0x5b0] sm:$0xff]
    %v206 = vld [vmem:[%s1 + $0x5b8] sm:$0xff]
    %v207 = vld [vmem:[%s1 + $0x5c0] sm:$0xff]
    %v208 = vld [vmem:[%s1 + $0x5c8] sm:$0xff]
    %v209 = vld [vmem:[%s1 + $0x5d0] sm:$0xff]
    %v210 = vld [vmem:[%s1 + $0x5d8] sm:$0xff]
    %v211 = vld [vmem:[%s1 + $0x5e0] sm:$0xff]
    %v212 = vld [vmem:[%s1 + $0x5e8] sm:$0xff]
    %v213 = vld [vmem:[%s1 + $0x5f0] sm:$0xff]
    %v214 = vld [vmem:[%s1 + $0x5f8] sm:$0xff]
    %v215 = vld [vmem:[%s1 + $0x600] sm:$0xff]
    %v216 = vld [vmem:[%s1 + $0x608] sm:$0xff]
    %v217 = vld [vmem:[%s1 + $0x610] sm:$0xff]
    %v218 = vld [vmem:[%s1 + $0x618] sm:$0xff]
    %v219 = vld [vmem:[%s1 + $0x620] sm:$0xff]
    %v220 = vld [vmem:[%s1 + $0x628] sm:$0xff]
    %v221 = vld [vmem:[%s1 + $0x630] sm:$0xff]
    %v222 = vld [vmem:[%s1 + $0x638] sm:$0xff]
    %v223 = vld [vmem:[%s1 + $0x640] sm:$0xff]
    %v224 = vld [vmem:[%s1 + $0x648] sm:$0xff]
    %v225 = vld [vmem:[%s1 + $0x650] sm:$0xff]
    %v226 = vld [vmem:[%s1 + $0x658] sm:$0xff]
    %v227 = vld [vmem:[%s1 + $0x660] sm:$0xff]
    %v228 = vld [vmem:[%s1 + $0x668] sm:$0xff]
    %v229 = vld [vmem:[%s1 + $0x670] sm:$0xff]
    %v230 = vld [vmem:[%s1 + $0x678] sm:$0xff]
    %v231 = vld [vmem:[%s1 + $0x680] sm:$0xff]
    %v232 = vld [vmem:[%s1 + $0x688] sm:$0xff]
    %v233 = vld [vmem:[%s1 + $0x690] sm:$0xff]
    %v234 = vld [vmem:[%s1 + $0x698] sm:$0xff]
    %v235 = vld [vmem:[%s1 + $0x6a0] sm:$0xff]
    %v236 = vld [vmem:[%s1 + $0x6a8] sm:$0xff]
    %v237 = vld [vmem:[%s1 + $0x6b0] sm:$0xff]
    %v238 = vld [vmem:[%s1 + $0x6b8] sm:$0xff]
    %v239 = vld [vmem:[%s1 + $0x6c0] sm:$0xff]
    %v240 = vld [vmem:[%s1 + $0x6c8] sm:$0xff]
    %v241 = vld [vmem:[%s1 + $0x6d0] sm:$0xff]
    %v242 = vld [vmem:[%s1 + $0x6d8] sm:$0xff]
    %v243 = vld [vmem:[%s1 + $0x6e0] sm:$0xff]
    %v244 = vld [vmem:[%s1 + $0x6e8] sm:$0xff]
    %v245 = vld [vmem:[%s1 + $0x6f0] sm:$0xff]
    %v246 = vld [vmem:[%s1 + $0x6f8] sm:$0xff]
    %v247 = vld [vmem:[%s1 + $0x700] sm:$0xff]
    %v248 = vld [vmem:[%s1 + $0x708] sm:$0xff]
    %v249 = vld [vmem:[%s1 + $0x710] sm:$0xff]
    %v250 = vld [vmem:[%s1 + $0x718] sm:$0xff]
    %v251 = vld [vmem:[%s1 + $0x720] sm:$0xff]
    %v252 = vld [vmem:[%s1 + $0x728] sm:$0xff]
    %v253 = vld [vmem:[%s1 + $0x730] sm:$0xff]
    %v254 = vld [vmem:[%s1 + $0x738] sm:$0xff]
    %v255 = vld [vmem:[%s1 + $0x740] sm:$0xff]
    %v256 = vld [vmem:[%s1 + $0x748] sm:$0xff]
    %v257 = vld [vmem:[%s1 + $0x750] sm:$0xff]
    %v258 = vld [vmem:[%s1 + $0x758] sm:$0xff]
    %v259 = vld [vmem:[%s1 + $0x760] sm:$0xff]
    %v260 = vld [vmem:[%s1 + $0x768] sm:$0xff]
    %v261 = vld [vmem:[%s1 + $0x770] sm:$0xff]
    %v262 = vld [vmem:[%s1 + $0x778] sm:$0xff]
    %v263 = vld [vmem:[%s1 + $0x780] sm:$0xff]
    %v264 = vld [vmem:[%s1 + $0x788] sm:$0xff]
    %v265 = vld [vmem:[%s1 + $0x790] sm:$0xff]
    %v266 = vld [vmem:[%s1 + $0x798] sm:$0xff]
    %v267 = vld [vmem:[%s1 + $0x7a0] sm:$0xff]
    %v268 = vld [vmem:[%s1 + $0x7a8] sm:$0xff]
    %v269 = vld [vmem:[%s1 + $0x7b0] sm:$0xff]
    %v270 = vld [vmem:[%s1 + $0x7b8] sm:$0xff]
    %v271 = vld [vmem:[%s1 + $0x7c0] sm:$0xff]
    %v272 = vld [vmem:[%s1 + $0x7c8] sm:$0xff]
    %v273 = vld [vmem:[%s1 + $0x7d0] sm:$0xff]
    %v274 = vld [vmem:[%s1 + $0x7d8] sm:$0xff]
    %v275 = vld [vmem:[%s1 + $0x7e0] sm:$0xff]
    %v276 = vld [vmem:[%s1 + $0x7e8] sm:$0xff]
    %v277 = vld [vmem:[%s1 + $0x7f0] sm:$0xff]
    %v278 = vld [vmem:[%s1 + $0x7f8] sm:$0xff]
    %v279 = vld [vmem:[%s1 + $0x800] sm:$0xff]
    %v280 = vld [vmem:[%s1 + $0x808] sm:$0xff]
    %v281 = vld [vmem:[%s1 + $0x810] sm:$0xff]
    %v282 = vld [vmem:[%s1 + $0x818] sm:$0xff]
    %v283 = vld [vmem:[%s1 + $0x820] sm:$0xff]
    %v284 = vld [vmem:[%s1 + $0x828] sm:$0xff]
    %v285 = vld [vmem:[%s1 + $0x830] sm:$0xff]
    %v286 = vld [vmem:[%s1 + $0x838] sm:$0xff]
    %v287 = vld [vmem:[%s1 + $0x840] sm:$0xff]
    %v288 = vld [vmem:[%s1 + $0x848] sm:$0xff]
    %v289 = vld [vmem:[%s1 + $0x850] sm:$0xff]
    %v290 = vld [vmem:[%s1 + $0x858] sm:$0xff]
    %v291 = vld [vmem:[%s1 + $0x860] sm:$0xff]
    %v292 = vld [vmem:[%s1 + $0x868] sm:$0xff]
    %v293 = vld [vmem:[%s1 + $0x870] sm:$0xff]
    %v294 = vld [vmem:[%s1 + $0x878] sm:$0xff]
    %v295 = vld [vmem:[%s1 + $0x880] sm:$0xff]
    %v296 = vld [vmem:[%s1 + $0x888] sm:$0xff]
    %v297 = vld [vmem:[%s1 + $0x890] sm:$0xff]
    %v298 = vld [vmem:[%s1 + $0x898] sm:$0xff]
    %v299 = vld [vmem:[%s1 + $0x8a0] sm:$0xff]
    %v300 = vld [vmem:[%s1 + $0x8a8] sm:$0xff]
    %v301 = vld [vmem:[%s1 + $0x8b0] sm:$0xff]
    %v302 = vld [vmem:[%s1 + $0x8b8] sm:$0xff]
    %v303 = vld [vmem:[%s1 + $0x8c0] sm:$0xff]
    %v304 = vld [vmem:[%s1 + $0x8c8] sm:$0xff]
    %v305 = vld [vmem:[%s1 + $0x8d0] sm:$0xff]
    %v306 = vld [vmem:[%s1 + $0x8d8] sm:$0xff]
    %v307 = vld [vmem:[%s1 + $0x8e0] sm:$0xff]
    %v308 = vld [vmem:[%s1 + $0x8e8] sm:$0xff]
    %v309 = vld [vmem:[%s1 + $0x8f0] sm:$0xff]
    %v310 = vld [vmem:[%s1 + $0x8f8] sm:$0xff]
    %v311 = vld [vmem:[%s1 + $0x900] sm:$0xff]
    %v312 = vld [vmem:[%s1 + $0x908] sm:$0xff]
    %v313 = vld [vmem:[%s1 + $0x910] sm:$0xff]
    %v314 = vld [vmem:[%s1 + $0x918] sm:$0xff]
    %v315 = vld [vmem:[%s1 + $0x920] sm:$0xff]
    %v316 = vld [vmem:[%s1 + $0x928] sm:$0xff]
    %v317 = vld [vmem:[%s1 + $0x930] sm:$0xff]
    %v318 = vld [vmem:[%s1 + $0x938] sm:$0xff]
    %v319 = vld [vmem:[%s1 + $0x940] sm:$0xff]
    %v320 = vld [vmem:[%s1 + $0x948] sm:$0xff]
    %v321 = vld [vmem:[%s1 + $0x950] sm:$0xff]
    %v322 = vld [vmem:[%s1 + $0x958] sm:$0xff]
    %v323 = vld [vmem:[%s1 + $0x960] sm:$0xff]
    %v324 = vld [vmem:[%s1 + $0x968] sm:$0xff]
    %v325 = vld [vmem:[%s1 + $0x970] sm:$0xff]
    %v326 = vld [vmem:[%s1 + $0x978] sm:$0xff]
    %v327 = vld [vmem:[%s1 + $0x980] sm:$0xff]
    %v328 = vld [vmem:[%s1 + $0x988] sm:$0xff]
    %v329 = vld [vmem:[%s1 + $0x990] sm:$0xff]
    %v330 = vld [vmem:[%s1 + $0x998] sm:$0xff]
    %v331 = vld [vmem:[%s1 + $0x9a0] sm:$0xff]
    %v332 = vld [vmem:[%s1 + $0x9a8] sm:$0xff]
    %v333 = vld [vmem:[%s1 + $0x9b0] sm:$0xff]
    %v334 = vld [vmem:[%s1 + $0x9b8] sm:$0xff]
    %v335 = vld [vmem:[%s1 + $0x9c0] sm:$0xff]
    %v336 = vld [vmem:[%s1 + $0x9c8] sm:$0xff]
    %v337 = vld [vmem:[%s1 + $0x9d0] sm:$0xff]
    %v338 = vld [vmem:[%s1 + $0x9d8] sm:$0xff]
    %v339 = vld [vmem:[%s1 + $0x9e0] sm:$0xff]
    %v340 = vld [vmem:[%s1 + $0x9e8] sm:$0xff]
    %v341 = vld [vmem:[%s1 + $0x9f0] sm:$0xff]
    %v342 = vld [vmem:[%s1 + $0x9f8] sm:$0xff]
    %v343 = vld [vmem:[%s1 + $0xa00] sm:$0xff]
    %v344 = vld [vmem:[%s1 + $0xa08] sm:$0xff]
    %v345 = vld [vmem:[%s1 + $0xa10] sm:$0xff]
    %v346 = vld [vmem:[%s1 + $0xa18] sm:$0xff]
    %v347 = vld [vmem:[%s1 + $0xa20] sm:$0xff]
    %v348 = vld [vmem:[%s1 + $0xa28] sm:$0xff]
    %v349 = vld [vmem:[%s1 + $0xa30] sm:$0xff]
    %v350 = vld [vmem:[%s1 + $0xa38] sm:$0xff]
    %v351 = vld [vmem:[%s1 + $0xa40] sm:$0xff]
    %v352 = vld [vmem:[%s1 + $0xa48] sm:$0xff]
    %v353 = vld [vmem:[%s1 + $0xa50] sm:$0xff]
    %v354 = vld [vmem:[%s1 + $0xa58] sm:$0xff]
    %v355 = vld [vmem:[%s1 + $0xa60] sm:$0xff]
    %v356 = vld [vmem:[%s1 + $0xa68] sm:$0xff]
    %v357 = vld [vmem:[%s1 + $0xa70] sm:$0xff]
    %v358 = vld [vmem:[%s1 + $0xa78] sm:$0xff]
    %v359 = vld [vmem:[%s1 + $0xa80] sm:$0xff]
    %v360 = vld [vmem:[%s1 + $0xa88] sm:$0xff]
    %v361 = vld [vmem:[%s1 + $0xa90] sm:$0xff]
    %v362 = vld [vmem:[%s1 + $0xa98] sm:$0xff]
    %v363 = vld [vmem:[%s1 + $0xaa0] sm:$0xff]
    %v364 = vld [vmem:[%s1 + $0xaa8] sm:$0xff]
    %v365 = vld [vmem:[%s1 + $0xab0] sm:$0xff]
    %v366 = vld [vmem:[%s1 + $0xab8] sm:$0xff]
    %v367 = vld [vmem:[%s1 + $0xac0] sm:$0xff]
    %v368 = vld [vmem:[%s1 + $0xac8] sm:$0xff]
    %v369 = vld [vmem:[%s1 + $0xad0] sm:$0xff]
    %v370 = vld [vmem:[%s1 + $0xad8] sm:$0xff]
    %v371 = vld [vmem:[%s1 + $0xae0] sm:$0xff]
    %v372 = vld [vmem:[%s1 + $0xae8] sm:$0xff]
    %v373 = vld [vmem:[%s1 + $0xaf0] sm:$0xff]
    %v374 = vld [vmem:[%s1 + $0xaf8] sm:$0xff]
    %v375 = vld [vmem:[%s1 + $0xb00] sm:$0xff]
    %v376 = vld [vmem:[%s1 + $0xb08] sm:$0xff]
    %v377 = vld [vmem:[%s1 + $0xb10] sm:$0xff]
    %v378 = vld [vmem:[%s1 + $0xb18] sm:$0xff]
    %v379 = vld [vmem:[%s1 + $0xb20] sm:$0xff]
    %v380 = vld [vmem:[%s1 + $0xb28] sm:$0xff]
    %v381 = vld [vmem:[%s1 + $0xb30] sm:$0xff]
    %v382 = vld [vmem:[%s1 + $0xb38] sm:$0xff]
    %v383 = vld [vmem:[%s1 + $0xb40] sm:$0xff]
    %v384 = vld [vmem:[%s1 + $0xb48] sm:$0xff]
    %v385 = vld [vmem:[%s1 + $0xb50] sm:$0xff]
    %v386 = vld [vmem:[%s1 + $0xb58] sm:$0xff]
    %v387 = vld [vmem:[%s1 + $0xb60] sm:$0xff]
    %v388 = vld [vmem:[%s1 + $0xb68] sm:$0xff]
    %v389 = vld [vmem:[%s1 + $0xb70] sm:$0xff]
    %v390 = vld [vmem:[%s1 + $0xb78] sm:$0xff]
    %v391 = vld [vmem:[%s1 + $0xb80] sm:$0xff]
    %v392 = vld [vmem:[%s1 + $0xb88] sm:$0xff]
    %v393 = vld [vmem:[%s1 + $0xb90] sm:$0xff]
    %v394 = vld [vmem:[%s1 + $0xb98] sm:$0xff]
    %v395 = vld [vmem:[%s1 + $0xba0] sm:$0xff]
    %v396 = vld [vmem:[%s1 + $0xba8] sm:$0xff]
    %v397 = vld [vmem:[%s1 + $0xbb0] sm:$0xff]
    %v398 = vld [vmem:[%s1 + $0xbb8] sm:$0xff]
    %v399 = vld [vmem:[%s1 + $0xbc0] sm:$0xff]
    %v400 = vld [vmem:[%s1 + $0xbc8] sm:$0xff]
    %v401 = vld [vmem:[%s1 + $0xbd0] sm:$0xff]
    %v402 = vld [vmem:[%s1 + $0xbd8] sm:$0xff]
    %v403 = vld [vmem:[%s1 + $0xbe0] sm:$0xff]
    %v404 = vld [vmem:[%s1 + $0xbe8] sm:$0xff]
    %v405 = vld [vmem:[%s1 + $0xbf0] sm:$0xff]
    %v406 = vld [vmem:[%s1 + $0xbf8] sm:$0xff]
    %v407 = vld [vmem:[%s1 + $0xc00] sm:$0xff]
    %v408 = vld [vmem:[%s1 + $0xc08] sm:$0xff]
    %v409 = vld [vmem:[%s1 + $0xc10] sm:$0xff]
    %v410 = vld [vmem:[%s1 + $0xc18] sm:$0xff]
    %v411 = vld [vmem:[%s1 + $0xc20] sm:$0xff]
    %v412 = vld [vmem:[%s1 + $0xc28] sm:$0xff]
    %v413 = vld [vmem:[%s1 + $0xc30] sm:$0xff]
    %v414 = vld [vmem:[%s1 + $0xc38] sm:$0xff]
    %v415 = vld [vmem:[%s1 + $0xc40] sm:$0xff]
    %v416 = vld [vmem:[%s1 + $0xc48] sm:$0xff]
    %v417 = vld [vmem:[%s1 + $0xc50] sm:$0xff]
    %v418 = vld [vmem:[%s1 + $0xc58] sm:$0xff]
    %v419 = vld [vmem:[%s1 + $0xc60] sm:$0xff]
    %v420 = vld [vmem:[%s1 + $0xc68] sm:$0xff]
    %v421 = vld [vmem:[%s1 + $0xc70] sm:$0xff]
    %v422 = vld [vmem:[%s1 + $0xc78] sm:$0xff]
    %v423 = vld [vmem:[%s1 + $0xc80] sm:$0xff]
    %v424 = vld [vmem:[%s1 + $0xc88] sm:$0xff]
    %v425 = vld [vmem:[%s1 + $0xc90] sm:$0xff]
    %v426 = vld [vmem:[%s1 + $0xc98] sm:$0xff]
    %v427 = vld [vmem:[%s1 + $0xca0] sm:$0xff]
    %v428 = vld [vmem:[%s1 + $0xca8] sm:$0xff]
    %v429 = vld [vmem:[%s1 + $0xcb0] sm:$0xff]
    %v430 = vld [vmem:[%s1 + $0xcb8] sm:$0xff]
    %v431 = vld [vmem:[%s1 + $0xcc0] sm:$0xff]
    %v432 = vld [vmem:[%s1 + $0xcc8] sm:$0xff]
    %v433 = vld [vmem:[%s1 + $0xcd0] sm:$0xff]
    %v434 = vld [vmem:[%s1 + $0xcd8] sm:$0xff]
    %v435 = vld [vmem:[%s1 + $0xce0] sm:$0xff]
    %v436 = vld [vmem:[%s1 + $0xce8] sm:$0xff]
    %v437 = vld [vmem:[%s1 + $0xcf0] sm:$0xff]
    %v438 = vld [vmem:[%s1 + $0xcf8] sm:$0xff]
    %v439 = vld [vmem:[%s2] sm:$0xff]
    %v440 = vld [vmem:[%s2 + $0x8] sm:$0x1f]
    %v443 = vlaneseq
    %v444 = vshrl.u32 %v443, 7
    %v445 = vsub.s32 0, %v444
    %v446 = vrot.slane %v439, %v445
    %v447 = vlaneseq
    %v448 = vshrl.u32 %v447, 7
    %v449 = vsub.s32 1, %v448
    %v450 = vrot.slane %v439, %v449
    %v451 = vlaneseq
    %v452 = vshrl.u32 %v451, 7
    %v453 = vsub.s32 2, %v452
    %v454 = vrot.slane %v439, %v453
    %v455 = vlaneseq
    %v456 = vshrl.u32 %v455, 7
    %v457 = vsub.s32 3, %v456
    %v458 = vrot.slane %v439, %v457
    %v459 = vlaneseq
    %v460 = vshrl.u32 %v459, 7
    %v461 = vsub.s32 4, %v460
    %v462 = vrot.slane %v439, %v461
    %v463 = vlaneseq
    %v464 = vshrl.u32 %v463, 7
    %v465 = vsub.s32 5, %v464
    %v466 = vrot.slane %v439, %v465
    %v467 = vlaneseq
    %v468 = vshrl.u32 %v467, 7
    %v469 = vsub.s32 6, %v468
    %v470 = vrot.slane %v439, %v469
    %v471 = vlaneseq
    %v472 = vshrl.u32 %v471, 7
    %v473 = vsub.s32 7, %v472
    %v474 = vrot.slane %v439, %v473
    %v475 = vlaneseq
    %v476 = vshrl.u32 %v475, 7
    %v477 = vsub.s32 0, %v476
    %v478 = vrot.slane %v440, %v477
    %v479 = vlaneseq
    %v480 = vshrl.u32 %v479, 7
    %v481 = vsub.s32 1, %v480
    %v482 = vrot.slane %v440, %v481
    %v483 = vlaneseq
    %v484 = vshrl.u32 %v483, 7
    %v485 = vsub.s32 2, %v484
    %v486 = vrot.slane %v440, %v485
    %v487 = vlaneseq
    %v488 = vshrl.u32 %v487, 7
    %v489 = vsub.s32 3, %v488
    %v490 = vrot.slane %v440, %v489
    %v491 = vlaneseq
    %v492 = vshrl.u32 %v491, 7
    %v493 = vsub.s32 4, %v492
    %v494 = vrot.slane %v440, %v493
    %508 = vmatprep.subr.mxu0 %v219
    %509 = vmatpush1.msra.mxu0 %v218
    %510 = vmatprep.subr.mxu0 %v206
    %511 = vmatpush1.msra.mxu0 %v205
    %512 = vmatprep.subr.mxu0 %v193
    %513 = vmatpush1.msra.mxu0 %v192
    %514 = vmatprep.subr.mxu0 %v180
    %515 = vmatpush1.msra.mxu0 %v179
    %516 = vmatprep.subr.mxu0 %v167
    %517 = vmatpush1.msra.mxu0 %v166
    %518 = vmatprep.subr.mxu0 %v154
    %519 = vmatpush1.msra.mxu0 %v153
    %520 = vmatprep.subr.mxu0 %v141
    %521 = vmatpush1.msra.mxu0 %v140
    %522 = vmatprep.subr.mxu0 %v128
    %523 = vmatpush1.msra.mxu0 %v127
    %524 = vmatprep.subr.mxu0 %v115
    %525 = vmatpush1.msra.mxu0 %v114
    %526 = vmatprep.subr.mxu0 %v102
    %527 = vmatpush1.msra.mxu0 %v101
    %528 = vmatprep.subr.mxu0 %v89
    %529 = vmatpush1.msra.mxu0 %v88
    %530 = vmatprep.subr.mxu0 %v76
    %531 = vmatpush1.msra.mxu0 %v75
    %532 = vmatprep.subr.mxu0 %v63
    %533 = vmatpush1.msra.mxu0 %v62
    %534 = vmatprep.subr.mxu0 %v50
    %535 = vmatpush1.msra.mxu0 %v49
    %536 = vmatprep.subr.mxu0 %v37
    %537 = vmatpush1.msra.mxu0 %v36
    %538 = vmatprep.subr.mxu0 %v24
    %539 = vmatpush1.msra.mxu0 %v23
    %540 = vmatprep.subr.mxu0 %v427
    %541 = vmatpush2.msra.mxu0 %v426
    %542 = vmatprep.subr.mxu0 %v414
    %543 = vmatpush2.msra.mxu0 %v413
    %544 = vmatprep.subr.mxu0 %v401
    %545 = vmatpush2.msra.mxu0 %v400
    %546 = vmatprep.subr.mxu0 %v388
    %547 = vmatpush2.msra.mxu0 %v387
    %548 = vmatprep.subr.mxu0 %v375
    %549 = vmatpush2.msra.mxu0 %v374
    %550 = vmatprep.subr.mxu0 %v362
    %551 = vmatpush2.msra.mxu0 %v361
    %552 = vmatprep.subr.mxu0 %v349
    %553 = vmatpush2.msra.mxu0 %v348
    %554 = vmatprep.subr.mxu0 %v336
    %555 = vmatpush2.msra.mxu0 %v335
    %556 = vmatprep.subr.mxu0 %v323
    %557 = vmatpush2.msra.mxu0 %v322
    %558 = vmatprep.subr.mxu0 %v310
    %559 = vmatpush2.msra.mxu0 %v309
    %560 = vmatprep.subr.mxu0 %v297
    %561 = vmatpush2.msra.mxu0 %v296
    %562 = vmatprep.subr.mxu0 %v284
    %563 = vmatpush2.msra.mxu0 %v283
    %564 = vmatprep.subr.mxu0 %v271
    %565 = vmatpush2.msra.mxu0 %v270
    %566 = vmatprep.subr.mxu0 %v258
    %567 = vmatpush2.msra.mxu0 %v257
    %568 = vmatprep.subr.mxu0 %v245
    %569 = vmatpush2.msra.mxu0 %v244
    %570 = vmatprep.subr.mxu0 %v232
    %571 = vmatpush2.msra.mxu0 %v231
    %572 = vmatprep.mubr.f32.mxu0 %v22
    %573 = vmatmul.mubr.f32.gmra.mxu0 %v21
    %v574 = vpop.f32.mrf.mxu0
    %v575 = vadd.f32 %v446, %v574
    %v576 = vpop.f32.mrf.mxu0
    %v577 = vadd.f32 %v450, %v576
    %578 = vdwg.mxu0
    %579 = vmatprep.subr.mxu0 %v221
    %580 = vmatpush1.msra.mxu0 %v220
    %581 = vmatprep.subr.mxu0 %v208
    %582 = vmatpush1.msra.mxu0 %v207
    %583 = vmatprep.subr.mxu0 %v195
    %584 = vmatpush1.msra.mxu0 %v194
    %585 = vmatprep.subr.mxu0 %v182
    %586 = vmatpush1.msra.mxu0 %v181
    %587 = vmatprep.subr.mxu0 %v169
    %588 = vmatpush1.msra.mxu0 %v168
    %589 = vmatprep.subr.mxu0 %v156
    %590 = vmatpush1.msra.mxu0 %v155
    %591 = vmatprep.subr.mxu0 %v143
    %592 = vmatpush1.msra.mxu0 %v142
    %593 = vmatprep.subr.mxu0 %v130
    %594 = vmatpush1.msra.mxu0 %v129
    %595 = vmatprep.subr.mxu0 %v117
    %596 = vmatpush1.msra.mxu0 %v116
    %597 = vmatprep.subr.mxu0 %v104
    %598 = vmatpush1.msra.mxu0 %v103
    %599 = vmatprep.subr.mxu0 %v91
    %600 = vmatpush1.msra.mxu0 %v90
    %601 = vmatprep.subr.mxu0 %v78
    %602 = vmatpush1.msra.mxu0 %v77
    %603 = vmatprep.subr.mxu0 %v65
    %604 = vmatpush1.msra.mxu0 %v64
    %605 = vmatprep.subr.mxu0 %v52
    %606 = vmatpush1.msra.mxu0 %v51
    %607 = vmatprep.subr.mxu0 %v39
    %608 = vmatpush1.msra.mxu0 %v38
    %609 = vmatprep.subr.mxu0 %v26
    %610 = vmatpush1.msra.mxu0 %v25
    %611 = vmatprep.subr.mxu0 %v429
    %612 = vmatpush2.msra.mxu0 %v428
    %613 = vmatprep.subr.mxu0 %v416
    %614 = vmatpush2.msra.mxu0 %v415
    %615 = vmatprep.subr.mxu0 %v403
    %616 = vmatpush2.msra.mxu0 %v402
    %617 = vmatprep.subr.mxu0 %v390
    %618 = vmatpush2.msra.mxu0 %v389
    %619 = vmatprep.subr.mxu0 %v377
    %620 = vmatpush2.msra.mxu0 %v376
    %621 = vmatprep.subr.mxu0 %v364
    %622 = vmatpush2.msra.mxu0 %v363
    %623 = vmatprep.subr.mxu0 %v351
    %624 = vmatpush2.msra.mxu0 %v350
    %625 = vmatprep.subr.mxu0 %v338
    %626 = vmatpush2.msra.mxu0 %v337
    %627 = vmatprep.subr.mxu0 %v325
    %628 = vmatpush2.msra.mxu0 %v324
    %629 = vmatprep.subr.mxu0 %v312
    %630 = vmatpush2.msra.mxu0 %v311
    %631 = vmatprep.subr.mxu0 %v299
    %632 = vmatpush2.msra.mxu0 %v298
    %633 = vmatprep.subr.mxu0 %v286
    %634 = vmatpush2.msra.mxu0 %v285
    %635 = vmatprep.subr.mxu0 %v273
    %636 = vmatpush2.msra.mxu0 %v272
    %637 = vmatprep.subr.mxu0 %v260
    %638 = vmatpush2.msra.mxu0 %v259
    %639 = vmatprep.subr.mxu0 %v247
    %640 = vmatpush2.msra.mxu0 %v246
    %641 = vmatprep.subr.mxu0 %v234
    %642 = vmatpush2.msra.mxu0 %v233
    %643 = vmatprep.mubr.f32.mxu0 %v22
    %644 = vmatmul.mubr.f32.gmra.mxu0 %v21
    %v645 = vpop.f32.mrf.mxu0
    %v646 = vadd.f32 %v454, %v645
    %v647 = vpop.f32.mrf.mxu0
    %v648 = vadd.f32 %v458, %v647
    %649 = vdwg.mxu0
    %650 = vmatprep.subr.mxu0 %v223
    %651 = vmatpush1.msra.mxu0 %v222
    %652 = vmatprep.subr.mxu0 %v210
    %653 = vmatpush1.msra.mxu0 %v209
    %654 = vmatprep.subr.mxu0 %v197
    %655 = vmatpush1.msra.mxu0 %v196
    %656 = vmatprep.subr.mxu0 %v184
    %657 = vmatpush1.msra.mxu0 %v183
    %658 = vmatprep.subr.mxu0 %v171
    %659 = vmatpush1.msra.mxu0 %v170
    %660 = vmatprep.subr.mxu0 %v158
    %661 = vmatpush1.msra.mxu0 %v157
    %662 = vmatprep.subr.mxu0 %v145
    %663 = vmatpush1.msra.mxu0 %v144
    %664 = vmatprep.subr.mxu0 %v132
    %665 = vmatpush1.msra.mxu0 %v131
    %666 = vmatprep.subr.mxu0 %v119
    %667 = vmatpush1.msra.mxu0 %v118
    %668 = vmatprep.subr.mxu0 %v106
    %669 = vmatpush1.msra.mxu0 %v105
    %670 = vmatprep.subr.mxu0 %v93
    %671 = vmatpush1.msra.mxu0 %v92
    %672 = vmatprep.subr.mxu0 %v80
    %673 = vmatpush1.msra.mxu0 %v79
    %674 = vmatprep.subr.mxu0 %v67
    %675 = vmatpush1.msra.mxu0 %v66
    %676 = vmatprep.subr.mxu0 %v54
    %677 = vmatpush1.msra.mxu0 %v53
    %678 = vmatprep.subr.mxu0 %v41
    %679 = vmatpush1.msra.mxu0 %v40
    %680 = vmatprep.subr.mxu0 %v28
    %681 = vmatpush1.msra.mxu0 %v27
    %682 = vmatprep.subr.mxu0 %v431
    %683 = vmatpush2.msra.mxu0 %v430
    %684 = vmatprep.subr.mxu0 %v418
    %685 = vmatpush2.msra.mxu0 %v417
    %686 = vmatprep.subr.mxu0 %v405
    %687 = vmatpush2.msra.mxu0 %v404
    %688 = vmatprep.subr.mxu0 %v392
    %689 = vmatpush2.msra.mxu0 %v391
    %690 = vmatprep.subr.mxu0 %v379
    %691 = vmatpush2.msra.mxu0 %v378
    %692 = vmatprep.subr.mxu0 %v366
    %693 = vmatpush2.msra.mxu0 %v365
    %694 = vmatprep.subr.mxu0 %v353
    %695 = vmatpush2.msra.mxu0 %v352
    %696 = vmatprep.subr.mxu0 %v340
    %697 = vmatpush2.msra.mxu0 %v339
    %698 = vmatprep.subr.mxu0 %v327
    %699 = vmatpush2.msra.mxu0 %v326
    %700 = vmatprep.subr.mxu0 %v314
    %701 = vmatpush2.msra.mxu0 %v313
    %702 = vmatprep.subr.mxu0 %v301
    %703 = vmatpush2.msra.mxu0 %v300
    %704 = vmatprep.subr.mxu0 %v288
    %705 = vmatpush2.msra.mxu0 %v287
    %706 = vmatprep.subr.mxu0 %v275
    %707 = vmatpush2.msra.mxu0 %v274
    %708 = vmatprep.subr.mxu0 %v262
    %709 = vmatpush2.msra.mxu0 %v261
    %710 = vmatprep.subr.mxu0 %v249
    %711 = vmatpush2.msra.mxu0 %v248
    %712 = vmatprep.subr.mxu0 %v236
    %713 = vmatpush2.msra.mxu0 %v235
    %714 = vmatprep.mubr.f32.mxu0 %v22
    %715 = vmatmul.mubr.f32.gmra.mxu0 %v21
    %v716 = vpop.f32.mrf.mxu0
    %v717 = vadd.f32 %v462, %v716
    %v718 = vpop.f32.mrf.mxu0
    %v719 = vadd.f32 %v466, %v718
    %720 = vdwg.mxu0
    %721 = vmatprep.subr.mxu0 %v225
    %722 = vmatpush1.msra.mxu0 %v224
    %723 = vmatprep.subr.mxu0 %v212
    %724 = vmatpush1.msra.mxu0 %v211
    %725 = vmatprep.subr.mxu0 %v199
    %726 = vmatpush1.msra.mxu0 %v198
    %727 = vmatprep.subr.mxu0 %v186
    %728 = vmatpush1.msra.mxu0 %v185
    %729 = vmatprep.subr.mxu0 %v173
    %730 = vmatpush1.msra.mxu0 %v172
    %731 = vmatprep.subr.mxu0 %v160
    %732 = vmatpush1.msra.mxu0 %v159
    %733 = vmatprep.subr.mxu0 %v147
    %734 = vmatpush1.msra.mxu0 %v146
    %735 = vmatprep.subr.mxu0 %v134
    %736 = vmatpush1.msra.mxu0 %v133
    %737 = vmatprep.subr.mxu0 %v121
    %738 = vmatpush1.msra.mxu0 %v120
    %739 = vmatprep.subr.mxu0 %v108
    %740 = vmatpush1.msra.mxu0 %v107
    %741 = vmatprep.subr.mxu0 %v95
    %742 = vmatpush1.msra.mxu0 %v94
    %743 = vmatprep.subr.mxu0 %v82
    %744 = vmatpush1.msra.mxu0 %v81
    %745 = vmatprep.subr.mxu0 %v69
    %746 = vmatpush1.msra.mxu0 %v68
    %747 = vmatprep.subr.mxu0 %v56
    %748 = vmatpush1.msra.mxu0 %v55
    %749 = vmatprep.subr.mxu0 %v43
    %750 = vmatpush1.msra.mxu0 %v42
    %751 = vmatprep.subr.mxu0 %v30
    %752 = vmatpush1.msra.mxu0 %v29
    %753 = vmatprep.subr.mxu0 %v433
    %754 = vmatpush2.msra.mxu0 %v432
    %755 = vmatprep.subr.mxu0 %v420
    %756 = vmatpush2.msra.mxu0 %v419
    %757 = vmatprep.subr.mxu0 %v407
    %758 = vmatpush2.msra.mxu0 %v406
    %759 = vmatprep.subr.mxu0 %v394
    %760 = vmatpush2.msra.mxu0 %v393
    %761 = vmatprep.subr.mxu0 %v381
    %762 = vmatpush2.msra.mxu0 %v380
    %763 = vmatprep.subr.mxu0 %v368
    %764 = vmatpush2.msra.mxu0 %v367
    %765 = vmatprep.subr.mxu0 %v355
    %766 = vmatpush2.msra.mxu0 %v354
    %767 = vmatprep.subr.mxu0 %v342
    %768 = vmatpush2.msra.mxu0 %v341
    %769 = vmatprep.subr.mxu0 %v329
    %770 = vmatpush2.msra.mxu0 %v328
    %771 = vmatprep.subr.mxu0 %v316
    %772 = vmatpush2.msra.mxu0 %v315
    %773 = vmatprep.subr.mxu0 %v303
    %774 = vmatpush2.msra.mxu0 %v302
    %775 = vmatprep.subr.mxu0 %v290
    %776 = vmatpush2.msra.mxu0 %v289
    %777 = vmatprep.subr.mxu0 %v277
    %778 = vmatpush2.msra.mxu0 %v276
    %779 = vmatprep.subr.mxu0 %v264
    %780 = vmatpush2.msra.mxu0 %v263
    %781 = vmatprep.subr.mxu0 %v251
    %782 = vmatpush2.msra.mxu0 %v250
    %783 = vmatprep.subr.mxu0 %v238
    %784 = vmatpush2.msra.mxu0 %v237
    %785 = vmatprep.mubr.f32.mxu0 %v22
    %786 = vmatmul.mubr.f32.gmra.mxu0 %v21
    %v787 = vpop.f32.mrf.mxu0
    %v788 = vadd.f32 %v470, %v787
    %v789 = vpop.f32.mrf.mxu0
    %v790 = vadd.f32 %v474, %v789
    %791 = vdwg.mxu0
    %792 = vmatprep.subr.mxu0 %v227
    %793 = vmatpush1.msra.mxu0 %v226
    %794 = vmatprep.subr.mxu0 %v214
    %795 = vmatpush1.msra.mxu0 %v213
    %796 = vmatprep.subr.mxu0 %v201
    %797 = vmatpush1.msra.mxu0 %v200
    %798 = vmatprep.subr.mxu0 %v188
    %799 = vmatpush1.msra.mxu0 %v187
    %800 = vmatprep.subr.mxu0 %v175
    %801 = vmatpush1.msra.mxu0 %v174
    %802 = vmatprep.subr.mxu0 %v162
    %803 = vmatpush1.msra.mxu0 %v161
    %804 = vmatprep.subr.mxu0 %v149
    %805 = vmatpush1.msra.mxu0 %v148
    %806 = vmatprep.subr.mxu0 %v136
    %807 = vmatpush1.msra.mxu0 %v135
    %808 = vmatprep.subr.mxu0 %v123
    %809 = vmatpush1.msra.mxu0 %v122
    %810 = vmatprep.subr.mxu0 %v110
    %811 = vmatpush1.msra.mxu0 %v109
    %812 = vmatprep.subr.mxu0 %v97
    %813 = vmatpush1.msra.mxu0 %v96
    %814 = vmatprep.subr.mxu0 %v84
    %815 = vmatpush1.msra.mxu0 %v83
    %816 = vmatprep.subr.mxu0 %v71
    %817 = vmatpush1.msra.mxu0 %v70
    %818 = vmatprep.subr.mxu0 %v58
    %819 = vmatpush1.msra.mxu0 %v57
    %820 = vmatprep.subr.mxu0 %v45
    %821 = vmatpush1.msra.mxu0 %v44
    %822 = vmatprep.subr.mxu0 %v32
    %823 = vmatpush1.msra.mxu0 %v31
    %824 = vmatprep.subr.mxu0 %v435
    %825 = vmatpush2.msra.mxu0 %v434
    %826 = vmatprep.subr.mxu0 %v422
    %827 = vmatpush2.msra.mxu0 %v421
    %828 = vmatprep.subr.mxu0 %v409
    %829 = vmatpush2.msra.mxu0 %v408
    %830 = vmatprep.subr.mxu0 %v396
    %831 = vmatpush2.msra.mxu0 %v395
    %832 = vmatprep.subr.mxu0 %v383
    %833 = vmatpush2.msra.mxu0 %v382
    %834 = vmatprep.subr.mxu0 %v370
    %835 = vmatpush2.msra.mxu0 %v369
    %836 = vmatprep.subr.mxu0 %v357
    %837 = vmatpush2.msra.mxu0 %v356
    %838 = vmatprep.subr.mxu0 %v344
    %839 = vmatpush2.msra.mxu0 %v343
    %840 = vmatprep.subr.mxu0 %v331
    %841 = vmatpush2.msra.mxu0 %v330
    %842 = vmatprep.subr.mxu0 %v318
    %843 = vmatpush2.msra.mxu0 %v317
    %844 = vmatprep.subr.mxu0 %v305
    %845 = vmatpush2.msra.mxu0 %v304
    %846 = vmatprep.subr.mxu0 %v292
    %847 = vmatpush2.msra.mxu0 %v291
    %848 = vmatprep.subr.mxu0 %v279
    %849 = vmatpush2.msra.mxu0 %v278
    %850 = vmatprep.subr.mxu0 %v266
    %851 = vmatpush2.msra.mxu0 %v265
    %852 = vmatprep.subr.mxu0 %v253
    %853 = vmatpush2.msra.mxu0 %v252
    %854 = vmatprep.subr.mxu0 %v240
    %855 = vmatpush2.msra.mxu0 %v239
    %856 = vmatprep.mubr.f32.mxu0 %v22
    %857 = vmatmul.mubr.f32.gmra.mxu0 %v21
    %v858 = vpop.f32.mrf.mxu0
    %v859 = vadd.f32 %v478, %v858
    %v860 = vpop.f32.mrf.mxu0
    %v861 = vadd.f32 %v482, %v860
    %862 = vdwg.mxu0
    %863 = vmatprep.subr.mxu0 %v229
    %864 = vmatpush1.msra.mxu0 %v228
    %865 = vmatprep.subr.mxu0 %v216
    %866 = vmatpush1.msra.mxu0 %v215
    %867 = vmatprep.subr.mxu0 %v203
    %868 = vmatpush1.msra.mxu0 %v202
    %869 = vmatprep.subr.mxu0 %v190
    %870 = vmatpush1.msra.mxu0 %v189
    %871 = vmatprep.subr.mxu0 %v177
    %872 = vmatpush1.msra.mxu0 %v176
    %873 = vmatprep.subr.mxu0 %v164
    %874 = vmatpush1.msra.mxu0 %v163
    %875 = vmatprep.subr.mxu0 %v151
    %876 = vmatpush1.msra.mxu0 %v150
    %877 = vmatprep.subr.mxu0 %v138
    %878 = vmatpush1.msra.mxu0 %v137
    %879 = vmatprep.subr.mxu0 %v125
    %880 = vmatpush1.msra.mxu0 %v124
    %881 = vmatprep.subr.mxu0 %v112
    %882 = vmatpush1.msra.mxu0 %v111
    %883 = vmatprep.subr.mxu0 %v99
    %884 = vmatpush1.msra.mxu0 %v98
    %885 = vmatprep.subr.mxu0 %v86
    %886 = vmatpush1.msra.mxu0 %v85
    %887 = vmatprep.subr.mxu0 %v73
    %888 = vmatpush1.msra.mxu0 %v72
    %889 = vmatprep.subr.mxu0 %v60
    %890 = vmatpush1.msra.mxu0 %v59
    %891 = vmatprep.subr.mxu0 %v47
    %892 = vmatpush1.msra.mxu0 %v46
    %893 = vmatprep.subr.mxu0 %v34
    %894 = vmatpush1.msra.mxu0 %v33
    %895 = vmatprep.subr.mxu0 %v437
    %896 = vmatpush2.msra.mxu0 %v436
    %897 = vmatprep.subr.mxu0 %v424
    %898 = vmatpush2.msra.mxu0 %v423
    %899 = vmatprep.subr.mxu0 %v411
    %900 = vmatpush2.msra.mxu0 %v410
    %901 = vmatprep.subr.mxu0 %v398
    %902 = vmatpush2.msra.mxu0 %v397
    %903 = vmatprep.subr.mxu0 %v385
    %904 = vmatpush2.msra.mxu0 %v384
    %905 = vmatprep.subr.mxu0 %v372
    %906 = vmatpush2.msra.mxu0 %v371
    %907 = vmatprep.subr.mxu0 %v359
    %908 = vmatpush2.msra.mxu0 %v358
    %909 = vmatprep.subr.mxu0 %v346
    %910 = vmatpush2.msra.mxu0 %v345
    %911 = vmatprep.subr.mxu0 %v333
    %912 = vmatpush2.msra.mxu0 %v332
    %913 = vmatprep.subr.mxu0 %v320
    %914 = vmatpush2.msra.mxu0 %v319
    %915 = vmatprep.subr.mxu0 %v307
    %916 = vmatpush2.msra.mxu0 %v306
    %917 = vmatprep.subr.mxu0 %v294
    %918 = vmatpush2.msra.mxu0 %v293
    %919 = vmatprep.subr.mxu0 %v281
    %920 = vmatpush2.msra.mxu0 %v280
    %921 = vmatprep.subr.mxu0 %v268
    %922 = vmatpush2.msra.mxu0 %v267
    %923 = vmatprep.subr.mxu0 %v255
    %924 = vmatpush2.msra.mxu0 %v254
    %925 = vmatprep.subr.mxu0 %v242
    %926 = vmatpush2.msra.mxu0 %v241
    %927 = vmatprep.mubr.f32.mxu0 %v22
    %928 = vmatmul.mubr.f32.gmra.mxu0 %v21
    %v929 = vpop.f32.mrf.mxu0
    %v930 = vadd.f32 %v486, %v929
    %v931 = vpop.f32.mrf.mxu0
    %v932 = vadd.f32 %v490, %v931
    %933 = vdwg.mxu0
    %934 = vmatprep.subr.mxu0 0.0
    %935 = vmatpush1.msra.mxu0 %v230
    %936 = vmatprep.subr.mxu0 0.0
    %937 = vmatpush1.msra.mxu0 %v217
    %938 = vmatprep.subr.mxu0 0.0
    %939 = vmatpush1.msra.mxu0 %v204
    %940 = vmatprep.subr.mxu0 0.0
    %941 = vmatpush1.msra.mxu0 %v191
    %942 = vmatprep.subr.mxu0 0.0
    %943 = vmatpush1.msra.mxu0 %v178
    %944 = vmatprep.subr.mxu0 0.0
    %945 = vmatpush1.msra.mxu0 %v165
    %946 = vmatprep.subr.mxu0 0.0
    %947 = vmatpush1.msra.mxu0 %v152
    %948 = vmatprep.subr.mxu0 0.0
    %949 = vmatpush1.msra.mxu0 %v139
    %950 = vmatprep.subr.mxu0 0.0
    %951 = vmatpush1.msra.mxu0 %v126
    %952 = vmatprep.subr.mxu0 0.0
    %953 = vmatpush1.msra.mxu0 %v113
    %954 = vmatprep.subr.mxu0 0.0
    %955 = vmatpush1.msra.mxu0 %v100
    %956 = vmatprep.subr.mxu0 0.0
    %957 = vmatpush1.msra.mxu0 %v87
    %958 = vmatprep.subr.mxu0 0.0
    %959 = vmatpush1.msra.mxu0 %v74
    %960 = vmatprep.subr.mxu0 0.0
    %961 = vmatpush1.msra.mxu0 %v61
    %962 = vmatprep.subr.mxu0 0.0
    %963 = vmatpush1.msra.mxu0 %v48
    %964 = vmatprep.subr.mxu0 0.0
    %965 = vmatpush1.msra.mxu0 %v35
    %966 = vmatprep.subr.mxu0 0.0
    %967 = vmatpush2.msra.mxu0 %v438
    %968 = vmatprep.subr.mxu0 0.0
    %969 = vmatpush2.msra.mxu0 %v425
    %970 = vmatprep.subr.mxu0 0.0
    %971 = vmatpush2.msra.mxu0 %v412
    %972 = vmatprep.subr.mxu0 0.0
    %973 = vmatpush2.msra.mxu0 %v399
    %974 = vmatprep.subr.mxu0 0.0
    %975 = vmatpush2.msra.mxu0 %v386
    %976 = vmatprep.subr.mxu0 0.0
    %977 = vmatpush2.msra.mxu0 %v373
    %978 = vmatprep.subr.mxu0 0.0
    %979 = vmatpush2.msra.mxu0 %v360
    %980 = vmatprep.subr.mxu0 0.0
    %981 = vmatpush2.msra.mxu0 %v347
    %982 = vmatprep.subr.mxu0 0.0
    %983 = vmatpush2.msra.mxu0 %v334
    %984 = vmatprep.subr.mxu0 0.0
    %985 = vmatpush2.msra.mxu0 %v321
    %986 = vmatprep.subr.mxu0 0.0
    %987 = vmatpush2.msra.mxu0 %v308
    %988 = vmatprep.subr.mxu0 0.0
    %989 = vmatpush2.msra.mxu0 %v295
    %990 = vmatprep.subr.mxu0 0.0
    %991 = vmatpush2.msra.mxu0 %v282
    %992 = vmatprep.subr.mxu0 0.0
    %993 = vmatpush2.msra.mxu0 %v269
    %994 = vmatprep.subr.mxu0 0.0
    %995 = vmatpush2.msra.mxu0 %v256
    %996 = vmatprep.subr.mxu0 0.0
    %997 = vmatpush2.msra.mxu0 %v243
    %998 = vmatprep.mubr.f32.mxu0 %v22
    %999 = vmatmul.mubr.f32.gmra.mxu0 %v21
    %v1000 = vpop.f32.mrf.mxu0
    %v1001 = vadd.f32 %v494, %v1000
    %v1002 = vpop.f32.mrf.mxu0
    %1003 = vdwg.mxu0
    %v1004 = vmax.f32 %v575, 0.0
    %v1005 = vmax.f32 %v577, 0.0
    %v1006 = vmax.f32 %v646, 0.0
    %v1007 = vmax.f32 %v648, 0.0
    %v1008 = vmax.f32 %v717, 0.0
    %v1009 = vmax.f32 %v719, 0.0
    %v1010 = vmax.f32 %v788, 0.0
    %v1011 = vmax.f32 %v790, 0.0
    %v1012 = vmax.f32 %v859, 0.0
    %v1013 = vmax.f32 %v861, 0.0
    %v1014 = vmax.f32 %v930, 0.0
    %v1015 = vmax.f32 %v932, 0.0
    %v1016 = vmax.f32 %v1001, 0.0
    %v1017 = vld [vmem:[%s3] sm:$0xff]
    %v1018 = vld [vmem:[%s3 + $0x8] sm:$0xff]
    %v1019 = vld [vmem:[%s3 + $0x10] sm:$0xff]
    %v1020 = vld [vmem:[%s3 + $0x18] sm:$0xff]
    %v1021 = vld [vmem:[%s3 + $0x20] sm:$0xff]
    %v1022 = vld [vmem:[%s3 + $0x28] sm:$0xff]
    %v1023 = vld [vmem:[%s3 + $0x30] sm:$0xff]
    %v1024 = vld [vmem:[%s3 + $0x38] sm:$0xff]
    %v1025 = vld [vmem:[%s3 + $0x40] sm:$0xff]
    %v1026 = vld [vmem:[%s3 + $0x48] sm:$0xff]
    %v1027 = vld [vmem:[%s3 + $0x50] sm:$0xff]
    %v1028 = vld [vmem:[%s3 + $0x58] sm:$0xff]
    %v1029 = vld [vmem:[%s3 + $0x60] sm:$0xff]
    %v1030 = vld [vmem:[%s3 + $0x68] sm:$0xff]
    %v1031 = vld [vmem:[%s3 + $0x70] sm:$0xff]
    %v1032 = vld [vmem:[%s3 + $0x78] sm:$0xff]
    %v1033 = vld [vmem:[%s3 + $0x80] sm:$0xff]
    %v1034 = vld [vmem:[%s3 + $0x88] sm:$0xff]
    %v1035 = vld [vmem:[%s3 + $0x90] sm:$0xff]
    %v1036 = vld [vmem:[%s3 + $0x98] sm:$0xff]
    %v1037 = vld [vmem:[%s3 + $0xa0] sm:$0xff]
    %v1038 = vld [vmem:[%s3 + $0xa8] sm:$0xff]
    %v1039 = vld [vmem:[%s3 + $0xb0] sm:$0xff]
    %v1040 = vld [vmem:[%s3 + $0xb8] sm:$0xff]
    %v1041 = vld [vmem:[%s3 + $0xc0] sm:$0xff]
    %v1042 = vld [vmem:[%s3 + $0xc8] sm:$0xff]
    %v1043 = vld [vmem:[%s3 + $0xd0] sm:$0xff]
    %v1044 = vld [vmem:[%s3 + $0xd8] sm:$0xff]
    %v1045 = vld [vmem:[%s3 + $0xe0] sm:$0xff]
    %v1046 = vld [vmem:[%s3 + $0xe8] sm:$0xff]
    %v1047 = vld [vmem:[%s3 + $0xf0] sm:$0xff]
    %v1048 = vld [vmem:[%s3 + $0xf8] sm:$0xff]
    %v1049 = vld [vmem:[%s3 + $0x100] sm:$0xff]
    %v1050 = vld [vmem:[%s3 + $0x108] sm:$0xff]
    %v1051 = vld [vmem:[%s3 + $0x110] sm:$0xff]
    %v1052 = vld [vmem:[%s3 + $0x118] sm:$0xff]
    %v1053 = vld [vmem:[%s3 + $0x120] sm:$0xff]
    %v1054 = vld [vmem:[%s3 + $0x128] sm:$0xff]
    %v1055 = vld [vmem:[%s3 + $0x130] sm:$0xff]
    %v1056 = vld [vmem:[%s3 + $0x138] sm:$0xff]
    %v1057 = vld [vmem:[%s3 + $0x140] sm:$0xff]
    %v1058 = vld [vmem:[%s3 + $0x148] sm:$0xff]
    %v1059 = vld [vmem:[%s3 + $0x150] sm:$0xff]
    %v1060 = vld [vmem:[%s3 + $0x158] sm:$0xff]
    %v1061 = vld [vmem:[%s3 + $0x160] sm:$0xff]
    %v1062 = vld [vmem:[%s3 + $0x168] sm:$0xff]
    %v1063 = vld [vmem:[%s3 + $0x170] sm:$0xff]
    %v1064 = vld [vmem:[%s3 + $0x178] sm:$0xff]
    %v1065 = vld [vmem:[%s3 + $0x180] sm:$0xff]
    %v1066 = vld [vmem:[%s3 + $0x188] sm:$0xff]
    %v1067 = vld [vmem:[%s3 + $0x190] sm:$0xff]
    %v1068 = vld [vmem:[%s3 + $0x198] sm:$0xff]
    %v1069 = vld [vmem:[%s3 + $0x1a0] sm:$0xff]
    %v1070 = vld [vmem:[%s3 + $0x1a8] sm:$0xff]
    %v1071 = vld [vmem:[%s3 + $0x1b0] sm:$0xff]
    %v1072 = vld [vmem:[%s3 + $0x1b8] sm:$0xff]
    %v1073 = vld [vmem:[%s3 + $0x1c0] sm:$0xff]
    %v1074 = vld [vmem:[%s3 + $0x1c8] sm:$0xff]
    %v1075 = vld [vmem:[%s3 + $0x1d0] sm:$0xff]
    %v1076 = vld [vmem:[%s3 + $0x1d8] sm:$0xff]
    %v1077 = vld [vmem:[%s3 + $0x1e0] sm:$0xff]
    %v1078 = vld [vmem:[%s3 + $0x1e8] sm:$0xff]
    %v1079 = vld [vmem:[%s3 + $0x1f0] sm:$0xff]
    %v1080 = vld [vmem:[%s3 + $0x1f8] sm:$0xff]
    %v1081 = vld [vmem:[%s3 + $0x200] sm:$0xff]
    %v1082 = vld [vmem:[%s3 + $0x208] sm:$0xff]
    %v1083 = vld [vmem:[%s3 + $0x210] sm:$0xff]
    %v1084 = vld [vmem:[%s3 + $0x218] sm:$0xff]
    %v1085 = vld [vmem:[%s3 + $0x220] sm:$0xff]
    %v1086 = vld [vmem:[%s3 + $0x228] sm:$0xff]
    %v1087 = vld [vmem:[%s3 + $0x230] sm:$0xff]
    %v1088 = vld [vmem:[%s3 + $0x238] sm:$0xff]
    %v1089 = vld [vmem:[%s3 + $0x240] sm:$0xff]
    %v1090 = vld [vmem:[%s3 + $0x248] sm:$0xff]
    %v1091 = vld [vmem:[%s3 + $0x250] sm:$0xff]
    %v1092 = vld [vmem:[%s3 + $0x258] sm:$0xff]
    %v1093 = vld [vmem:[%s3 + $0x260] sm:$0xff]
    %v1094 = vld [vmem:[%s3 + $0x268] sm:$0xff]
    %v1095 = vld [vmem:[%s3 + $0x270] sm:$0xff]
    %v1096 = vld [vmem:[%s3 + $0x278] sm:$0xff]
    %v1097 = vld [vmem:[%s3 + $0x280] sm:$0xff]
    %v1098 = vld [vmem:[%s3 + $0x288] sm:$0xff]
    %v1099 = vld [vmem:[%s3 + $0x290] sm:$0xff]
    %v1100 = vld [vmem:[%s3 + $0x298] sm:$0xff]
    %v1101 = vld [vmem:[%s3 + $0x2a0] sm:$0xff]
    %v1102 = vld [vmem:[%s3 + $0x2a8] sm:$0xff]
    %v1103 = vld [vmem:[%s3 + $0x2b0] sm:$0xff]
    %v1104 = vld [vmem:[%s3 + $0x2b8] sm:$0xff]
    %v1105 = vld [vmem:[%s3 + $0x2c0] sm:$0xff]
    %v1106 = vld [vmem:[%s3 + $0x2c8] sm:$0xff]
    %v1107 = vld [vmem:[%s3 + $0x2d0] sm:$0xff]
    %v1108 = vld [vmem:[%s3 + $0x2d8] sm:$0xff]
    %v1109 = vld [vmem:[%s3 + $0x2e0] sm:$0xff]
    %v1110 = vld [vmem:[%s3 + $0x2e8] sm:$0xff]
    %v1111 = vld [vmem:[%s3 + $0x2f0] sm:$0xff]
    %v1112 = vld [vmem:[%s3 + $0x2f8] sm:$0xff]
    %v1113 = vld [vmem:[%s3 + $0x300] sm:$0xff]
    %v1114 = vld [vmem:[%s3 + $0x308] sm:$0xff]
    %v1115 = vld [vmem:[%s3 + $0x310] sm:$0xff]
    %v1116 = vld [vmem:[%s3 + $0x318] sm:$0xff]
    %v1117 = vld [vmem:[%s3 + $0x320] sm:$0xff]
    %v1118 = vld [vmem:[%s3 + $0x328] sm:$0xff]
    %v1119 = vld [vmem:[%s3 + $0x330] sm:$0xff]
    %v1120 = vld [vmem:[%s3 + $0x338] sm:$0xff]
    %v1121 = vld [vmem:[%s3 + $0x340] sm:$0xff]
    %v1122 = vld [vmem:[%s3 + $0x348] sm:$0xff]
    %v1123 = vld [vmem:[%s3 + $0x350] sm:$0xff]
    %v1124 = vld [vmem:[%s3 + $0x358] sm:$0xff]
    %v1125 = vld [vmem:[%s3 + $0x360] sm:$0xff]
    %v1126 = vld [vmem:[%s3 + $0x368] sm:$0xff]
    %v1127 = vld [vmem:[%s3 + $0x370] sm:$0xff]
    %v1128 = vld [vmem:[%s3 + $0x378] sm:$0xff]
    %v1129 = vld [vmem:[%s3 + $0x380] sm:$0xff]
    %v1130 = vld [vmem:[%s3 + $0x388] sm:$0xff]
    %v1131 = vld [vmem:[%s3 + $0x390] sm:$0xff]
    %v1132 = vld [vmem:[%s3 + $0x398] sm:$0xff]
    %v1133 = vld [vmem:[%s3 + $0x3a0] sm:$0xff]
    %v1134 = vld [vmem:[%s3 + $0x3a8] sm:$0xff]
    %v1135 = vld [vmem:[%s3 + $0x3b0] sm:$0xff]
    %v1136 = vld [vmem:[%s3 + $0x3b8] sm:$0xff]
    %v1137 = vld [vmem:[%s3 + $0x3c0] sm:$0xff]
    %v1138 = vld [vmem:[%s3 + $0x3c8] sm:$0xff]
    %v1139 = vld [vmem:[%s3 + $0x3d0] sm:$0xff]
    %v1140 = vld [vmem:[%s3 + $0x3d8] sm:$0xff]
    %v1141 = vld [vmem:[%s3 + $0x3e0] sm:$0xff]
    %v1142 = vld [vmem:[%s3 + $0x3e8] sm:$0xff]
    %v1143 = vld [vmem:[%s3 + $0x3f0] sm:$0xff]
    %v1144 = vld [vmem:[%s3 + $0x3f8] sm:$0xff]
    %v1145 = vld [vmem:[%s3 + $0x400] sm:$0xff]
    %v1146 = vld [vmem:[%s3 + $0x408] sm:$0xff]
    %v1147 = vld [vmem:[%s3 + $0x410] sm:$0xff]
    %v1148 = vld [vmem:[%s3 + $0x418] sm:$0xff]
    %v1149 = vld [vmem:[%s3 + $0x420] sm:$0xff]
    %v1150 = vld [vmem:[%s3 + $0x428] sm:$0xff]
    %v1151 = vld [vmem:[%s3 + $0x430] sm:$0xff]
    %v1152 = vld [vmem:[%s3 + $0x438] sm:$0xff]
    %v1153 = vld [vmem:[%s3 + $0x440] sm:$0xff]
    %v1154 = vld [vmem:[%s3 + $0x448] sm:$0xff]
    %v1155 = vld [vmem:[%s3 + $0x450] sm:$0xff]
    %v1156 = vld [vmem:[%s3 + $0x458] sm:$0xff]
    %v1157 = vld [vmem:[%s3 + $0x460] sm:$0xff]
    %v1158 = vld [vmem:[%s3 + $0x468] sm:$0xff]
    %v1159 = vld [vmem:[%s3 + $0x470] sm:$0xff]
    %v1160 = vld [vmem:[%s3 + $0x478] sm:$0xff]
    %v1161 = vld [vmem:[%s3 + $0x480] sm:$0xff]
    %v1162 = vld [vmem:[%s3 + $0x488] sm:$0xff]
    %v1163 = vld [vmem:[%s3 + $0x490] sm:$0xff]
    %v1164 = vld [vmem:[%s3 + $0x498] sm:$0xff]
    %v1165 = vld [vmem:[%s3 + $0x4a0] sm:$0xff]
    %v1166 = vld [vmem:[%s3 + $0x4a8] sm:$0xff]
    %v1167 = vld [vmem:[%s3 + $0x4b0] sm:$0xff]
    %v1168 = vld [vmem:[%s3 + $0x4b8] sm:$0xff]
    %v1169 = vld [vmem:[%s3 + $0x4c0] sm:$0xff]
    %v1170 = vld [vmem:[%s3 + $0x4c8] sm:$0xff]
    %v1171 = vld [vmem:[%s3 + $0x4d0] sm:$0xff]
    %v1172 = vld [vmem:[%s3 + $0x4d8] sm:$0xff]
    %v1173 = vld [vmem:[%s3 + $0x4e0] sm:$0xff]
    %v1174 = vld [vmem:[%s3 + $0x4e8] sm:$0xff]
    %v1175 = vld [vmem:[%s3 + $0x4f0] sm:$0xff]
    %v1176 = vld [vmem:[%s3 + $0x4f8] sm:$0xff]
    %v1177 = vld [vmem:[%s3 + $0x500] sm:$0xff]
    %v1178 = vld [vmem:[%s3 + $0x508] sm:$0xff]
    %v1179 = vld [vmem:[%s3 + $0x510] sm:$0xff]
    %v1180 = vld [vmem:[%s3 + $0x518] sm:$0xff]
    %v1181 = vld [vmem:[%s3 + $0x520] sm:$0xff]
    %v1182 = vld [vmem:[%s3 + $0x528] sm:$0xff]
    %v1183 = vld [vmem:[%s3 + $0x530] sm:$0xff]
    %v1184 = vld [vmem:[%s3 + $0x538] sm:$0xff]
    %v1185 = vld [vmem:[%s3 + $0x540] sm:$0xff]
    %v1186 = vld [vmem:[%s3 + $0x548] sm:$0xff]
    %v1187 = vld [vmem:[%s3 + $0x550] sm:$0xff]
    %v1188 = vld [vmem:[%s3 + $0x558] sm:$0xff]
    %v1189 = vld [vmem:[%s3 + $0x560] sm:$0xff]
    %v1190 = vld [vmem:[%s3 + $0x568] sm:$0xff]
    %v1191 = vld [vmem:[%s3 + $0x570] sm:$0xff]
    %v1192 = vld [vmem:[%s3 + $0x578] sm:$0xff]
    %v1193 = vld [vmem:[%s3 + $0x580] sm:$0xff]
    %v1194 = vld [vmem:[%s3 + $0x588] sm:$0xff]
    %v1195 = vld [vmem:[%s3 + $0x590] sm:$0xff]
    %v1196 = vld [vmem:[%s3 + $0x598] sm:$0xff]
    %v1197 = vld [vmem:[%s3 + $0x5a0] sm:$0xff]
    %v1198 = vld [vmem:[%s3 + $0x5a8] sm:$0xff]
    %v1199 = vld [vmem:[%s3 + $0x5b0] sm:$0xff]
    %v1200 = vld [vmem:[%s3 + $0x5b8] sm:$0xff]
    %v1201 = vld [vmem:[%s3 + $0x5c0] sm:$0xff]
    %v1202 = vld [vmem:[%s3 + $0x5c8] sm:$0xff]
    %v1203 = vld [vmem:[%s3 + $0x5d0] sm:$0xff]
    %v1204 = vld [vmem:[%s3 + $0x5d8] sm:$0xff]
    %v1205 = vld [vmem:[%s3 + $0x5e0] sm:$0xff]
    %v1206 = vld [vmem:[%s3 + $0x5e8] sm:$0xff]
    %v1207 = vld [vmem:[%s3 + $0x5f0] sm:$0xff]
    %v1208 = vld [vmem:[%s3 + $0x5f8] sm:$0xff]
    %v1209 = vld [vmem:[%s3 + $0x600] sm:$0xff]
    %v1210 = vld [vmem:[%s3 + $0x608] sm:$0xff]
    %v1211 = vld [vmem:[%s3 + $0x610] sm:$0xff]
    %v1212 = vld [vmem:[%s3 + $0x618] sm:$0xff]
    %v1213 = vld [vmem:[%s4] sm:$0x1]
    %v1215 = vlaneseq
    %v1216 = vshrl.u32 %v1215, 7
    %v1217 = vsub.s32 0, %v1216
    %v1218 = vrot.slane %v1213, %v1217
    %vm1220 = vcmask 261120
    %v1222 = vsel %vm1220, %v1016, 0
    %1224 = vmatprep.subr.mxu0 0.0
    %1225 = vmatpush1.msra.mxu0 %v1032
    %1226 = vmatprep.subr.mxu0 0.0
    %1227 = vmatpush1.msra.mxu0 %v1031
    %1228 = vmatprep.subr.mxu0 0.0
    %1229 = vmatpush1.msra.mxu0 %v1030
    %1230 = vmatprep.subr.mxu0 0.0
    %1231 = vmatpush1.msra.mxu0 %v1029
    %1232 = vmatprep.subr.mxu0 0.0
    %1233 = vmatpush1.msra.mxu0 %v1028
    %1234 = vmatprep.subr.mxu0 0.0
    %1235 = vmatpush1.msra.mxu0 %v1027
    %1236 = vmatprep.subr.mxu0 0.0
    %1237 = vmatpush1.msra.mxu0 %v1026
    %1238 = vmatprep.subr.mxu0 0.0
    %1239 = vmatpush1.msra.mxu0 %v1025
    %1240 = vmatprep.subr.mxu0 0.0
    %1241 = vmatpush1.msra.mxu0 %v1024
    %1242 = vmatprep.subr.mxu0 0.0
    %1243 = vmatpush1.msra.mxu0 %v1023
    %1244 = vmatprep.subr.mxu0 0.0
    %1245 = vmatpush1.msra.mxu0 %v1022
    %1246 = vmatprep.subr.mxu0 0.0
    %1247 = vmatpush1.msra.mxu0 %v1021
    %1248 = vmatprep.subr.mxu0 0.0
    %1249 = vmatpush1.msra.mxu0 %v1020
    %1250 = vmatprep.subr.mxu0 0.0
    %1251 = vmatpush1.msra.mxu0 %v1019
    %1252 = vmatprep.subr.mxu0 0.0
    %1253 = vmatpush1.msra.mxu0 %v1018
    %1254 = vmatprep.subr.mxu0 0.0
    %1255 = vmatpush1.msra.mxu0 %v1017
    %1256 = vmatprep.subr.mxu0 0.0
    %1257 = vmatpush2.msra.mxu0 %v1048
    %1258 = vmatprep.subr.mxu0 0.0
    %1259 = vmatpush2.msra.mxu0 %v1047
    %1260 = vmatprep.subr.mxu0 0.0
    %1261 = vmatpush2.msra.mxu0 %v1046
    %1262 = vmatprep.subr.mxu0 0.0
    %1263 = vmatpush2.msra.mxu0 %v1045
    %1264 = vmatprep.subr.mxu0 0.0
    %1265 = vmatpush2.msra.mxu0 %v1044
    %1266 = vmatprep.subr.mxu0 0.0
    %1267 = vmatpush2.msra.mxu0 %v1043
    %1268 = vmatprep.subr.mxu0 0.0
    %1269 = vmatpush2.msra.mxu0 %v1042
    %1270 = vmatprep.subr.mxu0 0.0
    %1271 = vmatpush2.msra.mxu0 %v1041
    %1272 = vmatprep.subr.mxu0 0.0
    %1273 = vmatpush2.msra.mxu0 %v1040
    %1274 = vmatprep.subr.mxu0 0.0
    %1275 = vmatpush2.msra.mxu0 %v1039
    %1276 = vmatprep.subr.mxu0 0.0
    %1277 = vmatpush2.msra.mxu0 %v1038
    %1278 = vmatprep.subr.mxu0 0.0
    %1279 = vmatpush2.msra.mxu0 %v1037
    %1280 = vmatprep.subr.mxu0 0.0
    %1281 = vmatpush2.msra.mxu0 %v1036
    %1282 = vmatprep.subr.mxu0 0.0
    %1283 = vmatpush2.msra.mxu0 %v1035
    %1284 = vmatprep.subr.mxu0 0.0
    %1285 = vmatpush2.msra.mxu0 %v1034
    %1286 = vmatprep.subr.mxu0 0.0
    %1287 = vmatpush2.msra.mxu0 %v1033
    %1288 = vmatprep.mubr.f32.mxu0 %v1005
    %1289 = vmatmul.mubr.f32.gmra.mxu0 %v1004
    %v1290 = vpop.f32.mrf.mxu0
    %v1291 = vadd.f32 %v1218, %v1290
    %v1292 = vpop.f32.mrf.mxu0
    %1293 = vdwg.mxu0
    %1294 = vmatprep.subr.mxu0 0.0
    %1295 = vmatpush1.msra.mxu0 %v1064
    %1296 = vmatprep.subr.mxu0 0.0
    %1297 = vmatpush1.msra.mxu0 %v1063
    %1298 = vmatprep.subr.mxu0 0.0
    %1299 = vmatpush1.msra.mxu0 %v1062
    %1300 = vmatprep.subr.mxu0 0.0
    %1301 = vmatpush1.msra.mxu0 %v1061
    %1302 = vmatprep.subr.mxu0 0.0
    %1303 = vmatpush1.msra.mxu0 %v1060
    %1304 = vmatprep.subr.mxu0 0.0
    %1305 = vmatpush1.msra.mxu0 %v1059
    %1306 = vmatprep.subr.mxu0 0.0
    %1307 = vmatpush1.msra.mxu0 %v1058
    %1308 = vmatprep.subr.mxu0 0.0
    %1309 = vmatpush1.msra.mxu0 %v1057
    %1310 = vmatprep.subr.mxu0 0.0
    %1311 = vmatpush1.msra.mxu0 %v1056
    %1312 = vmatprep.subr.mxu0 0.0
    %1313 = vmatpush1.msra.mxu0 %v1055
    %1314 = vmatprep.subr.mxu0 0.0
    %1315 = vmatpush1.msra.mxu0 %v1054
    %1316 = vmatprep.subr.mxu0 0.0
    %1317 = vmatpush1.msra.mxu0 %v1053
    %1318 = vmatprep.subr.mxu0 0.0
    %1319 = vmatpush1.msra.mxu0 %v1052
    %1320 = vmatprep.subr.mxu0 0.0
    %1321 = vmatpush1.msra.mxu0 %v1051
    %1322 = vmatprep.subr.mxu0 0.0
    %1323 = vmatpush1.msra.mxu0 %v1050
    %1324 = vmatprep.subr.mxu0 0.0
    %1325 = vmatpush1.msra.mxu0 %v1049
    %1326 = vmatprep.subr.mxu0 0.0
    %1327 = vmatpush2.msra.mxu0 %v1080
    %1328 = vmatprep.subr.mxu0 0.0
    %1329 = vmatpush2.msra.mxu0 %v1079
    %1330 = vmatprep.subr.mxu0 0.0
    %1331 = vmatpush2.msra.mxu0 %v1078
    %1332 = vmatprep.subr.mxu0 0.0
    %1333 = vmatpush2.msra.mxu0 %v1077
    %1334 = vmatprep.subr.mxu0 0.0
    %1335 = vmatpush2.msra.mxu0 %v1076
    %1336 = vmatprep.subr.mxu0 0.0
    %1337 = vmatpush2.msra.mxu0 %v1075
    %1338 = vmatprep.subr.mxu0 0.0
    %1339 = vmatpush2.msra.mxu0 %v1074
    %1340 = vmatprep.subr.mxu0 0.0
    %1341 = vmatpush2.msra.mxu0 %v1073
    %1342 = vmatprep.subr.mxu0 0.0
    %1343 = vmatpush2.msra.mxu0 %v1072
    %1344 = vmatprep.subr.mxu0 0.0
    %1345 = vmatpush2.msra.mxu0 %v1071
    %1346 = vmatprep.subr.mxu0 0.0
    %1347 = vmatpush2.msra.mxu0 %v1070
    %1348 = vmatprep.subr.mxu0 0.0
    %1349 = vmatpush2.msra.mxu0 %v1069
    %1350 = vmatprep.subr.mxu0 0.0
    %1351 = vmatpush2.msra.mxu0 %v1068
    %1352 = vmatprep.subr.mxu0 0.0
    %1353 = vmatpush2.msra.mxu0 %v1067
    %1354 = vmatprep.subr.mxu0 0.0
    %1355 = vmatpush2.msra.mxu0 %v1066
    %1356 = vmatprep.subr.mxu0 0.0
    %1357 = vmatpush2.msra.mxu0 %v1065
    %1358 = vmatprep.mubr.f32.mxu0 %v1007
    %1359 = vmatmul.mubr.f32.gmra.mxu0 %v1006
    %v1360 = vpop.f32.mrf.mxu0
    %v1361 = vadd.f32 %v1291, %v1360
    %v1362 = vpop.f32.mrf.mxu0
    %1363 = vdwg.mxu0
    %1364 = vmatprep.subr.mxu0 0.0
    %1365 = vmatpush1.msra.mxu0 %v1096
    %1366 = vmatprep.subr.mxu0 0.0
    %1367 = vmatpush1.msra.mxu0 %v1095
    %1368 = vmatprep.subr.mxu0 0.0
    %1369 = vmatpush1.msra.mxu0 %v1094
    %1370 = vmatprep.subr.mxu0 0.0
    %1371 = vmatpush1.msra.mxu0 %v1093
    %1372 = vmatprep.subr.mxu0 0.0
    %1373 = vmatpush1.msra.mxu0 %v1092
    %1374 = vmatprep.subr.mxu0 0.0
    %1375 = vmatpush1.msra.mxu0 %v1091
    %1376 = vmatprep.subr.mxu0 0.0
    %1377 = vmatpush1.msra.mxu0 %v1090
    %1378 = vmatprep.subr.mxu0 0.0
    %1379 = vmatpush1.msra.mxu0 %v1089
    %1380 = vmatprep.subr.mxu0 0.0
    %1381 = vmatpush1.msra.mxu0 %v1088
    %1382 = vmatprep.subr.mxu0 0.0
    %1383 = vmatpush1.msra.mxu0 %v1087
    %1384 = vmatprep.subr.mxu0 0.0
    %1385 = vmatpush1.msra.mxu0 %v1086
    %1386 = vmatprep.subr.mxu0 0.0
    %1387 = vmatpush1.msra.mxu0 %v1085
    %1388 = vmatprep.subr.mxu0 0.0
    %1389 = vmatpush1.msra.mxu0 %v1084
    %1390 = vmatprep.subr.mxu0 0.0
    %1391 = vmatpush1.msra.mxu0 %v1083
    %1392 = vmatprep.subr.mxu0 0.0
    %1393 = vmatpush1.msra.mxu0 %v1082
    %1394 = vmatprep.subr.mxu0 0.0
    %1395 = vmatpush1.msra.mxu0 %v1081
    %1396 = vmatprep.subr.mxu0 0.0
    %1397 = vmatpush2.msra.mxu0 %v1112
    %1398 = vmatprep.subr.mxu0 0.0
    %1399 = vmatpush2.msra.mxu0 %v1111
    %1400 = vmatprep.subr.mxu0 0.0
    %1401 = vmatpush2.msra.mxu0 %v1110
    %1402 = vmatprep.subr.mxu0 0.0
    %1403 = vmatpush2.msra.mxu0 %v1109
    %1404 = vmatprep.subr.mxu0 0.0
    %1405 = vmatpush2.msra.mxu0 %v1108
    %1406 = vmatprep.subr.mxu0 0.0
    %1407 = vmatpush2.msra.mxu0 %v1107
    %1408 = vmatprep.subr.mxu0 0.0
    %1409 = vmatpush2.msra.mxu0 %v1106
    %1410 = vmatprep.subr.mxu0 0.0
    %1411 = vmatpush2.msra.mxu0 %v1105
    %1412 = vmatprep.subr.mxu0 0.0
    %1413 = vmatpush2.msra.mxu0 %v1104
    %1414 = vmatprep.subr.mxu0 0.0
    %1415 = vmatpush2.msra.mxu0 %v1103
    %1416 = vmatprep.subr.mxu0 0.0
    %1417 = vmatpush2.msra.mxu0 %v1102
    %1418 = vmatprep.subr.mxu0 0.0
    %1419 = vmatpush2.msra.mxu0 %v1101
    %1420 = vmatprep.subr.mxu0 0.0
    %1421 = vmatpush2.msra.mxu0 %v1100
    %1422 = vmatprep.subr.mxu0 0.0
    %1423 = vmatpush2.msra.mxu0 %v1099
    %1424 = vmatprep.subr.mxu0 0.0
    %1425 = vmatpush2.msra.mxu0 %v1098
    %1426 = vmatprep.subr.mxu0 0.0
    %1427 = vmatpush2.msra.mxu0 %v1097
    %1428 = vmatprep.mubr.f32.mxu0 %v1009
    %1429 = vmatmul.mubr.f32.gmra.mxu0 %v1008
    %v1430 = vpop.f32.mrf.mxu0
    %v1431 = vadd.f32 %v1361, %v1430
    %v1432 = vpop.f32.mrf.mxu0
    %1433 = vdwg.mxu0
    %1434 = vmatprep.subr.mxu0 0.0
    %1435 = vmatpush1.msra.mxu0 %v1128
    %1436 = vmatprep.subr.mxu0 0.0
    %1437 = vmatpush1.msra.mxu0 %v1127
    %1438 = vmatprep.subr.mxu0 0.0
    %1439 = vmatpush1.msra.mxu0 %v1126
    %1440 = vmatprep.subr.mxu0 0.0
    %1441 = vmatpush1.msra.mxu0 %v1125
    %1442 = vmatprep.subr.mxu0 0.0
    %1443 = vmatpush1.msra.mxu0 %v1124
    %1444 = vmatprep.subr.mxu0 0.0
    %1445 = vmatpush1.msra.mxu0 %v1123
    %1446 = vmatprep.subr.mxu0 0.0
    %1447 = vmatpush1.msra.mxu0 %v1122
    %1448 = vmatprep.subr.mxu0 0.0
    %1449 = vmatpush1.msra.mxu0 %v1121
    %1450 = vmatprep.subr.mxu0 0.0
    %1451 = vmatpush1.msra.mxu0 %v1120
    %1452 = vmatprep.subr.mxu0 0.0
    %1453 = vmatpush1.msra.mxu0 %v1119
    %1454 = vmatprep.subr.mxu0 0.0
    %1455 = vmatpush1.msra.mxu0 %v1118
    %1456 = vmatprep.subr.mxu0 0.0
    %1457 = vmatpush1.msra.mxu0 %v1117
    %1458 = vmatprep.subr.mxu0 0.0
    %1459 = vmatpush1.msra.mxu0 %v1116
    %1460 = vmatprep.subr.mxu0 0.0
    %1461 = vmatpush1.msra.mxu0 %v1115
    %1462 = vmatprep.subr.mxu0 0.0
    %1463 = vmatpush1.msra.mxu0 %v1114
    %1464 = vmatprep.subr.mxu0 0.0
    %1465 = vmatpush1.msra.mxu0 %v1113
    %1466 = vmatprep.subr.mxu0 0.0
    %1467 = vmatpush2.msra.mxu0 %v1144
    %1468 = vmatprep.subr.mxu0 0.0
    %1469 = vmatpush2.msra.mxu0 %v1143
    %1470 = vmatprep.subr.mxu0 0.0
    %1471 = vmatpush2.msra.mxu0 %v1142
    %1472 = vmatprep.subr.mxu0 0.0
    %1473 = vmatpush2.msra.mxu0 %v1141
    %1474 = vmatprep.subr.mxu0 0.0
    %1475 = vmatpush2.msra.mxu0 %v1140
    %1476 = vmatprep.subr.mxu0 0.0
    %1477 = vmatpush2.msra.mxu0 %v1139
    %1478 = vmatprep.subr.mxu0 0.0
    %1479 = vmatpush2.msra.mxu0 %v1138
    %1480 = vmatprep.subr.mxu0 0.0
    %1481 = vmatpush2.msra.mxu0 %v1137
    %1482 = vmatprep.subr.mxu0 0.0
    %1483 = vmatpush2.msra.mxu0 %v1136
    %1484 = vmatprep.subr.mxu0 0.0
    %1485 = vmatpush2.msra.mxu0 %v1135
    %1486 = vmatprep.subr.mxu0 0.0
    %1487 = vmatpush2.msra.mxu0 %v1134
    %1488 = vmatprep.subr.mxu0 0.0
    %1489 = vmatpush2.msra.mxu0 %v1133
    %1490 = vmatprep.subr.mxu0 0.0
    %1491 = vmatpush2.msra.mxu0 %v1132
    %1492 = vmatprep.subr.mxu0 0.0
    %1493 = vmatpush2.msra.mxu0 %v1131
    %1494 = vmatprep.subr.mxu0 0.0
    %1495 = vmatpush2.msra.mxu0 %v1130
    %1496 = vmatprep.subr.mxu0 0.0
    %1497 = vmatpush2.msra.mxu0 %v1129
    %1498 = vmatprep.mubr.f32.mxu0 %v1011
    %1499 = vmatmul.mubr.f32.gmra.mxu0 %v1010
    %v1500 = vpop.f32.mrf.mxu0
    %v1501 = vadd.f32 %v1431, %v1500
    %v1502 = vpop.f32.mrf.mxu0
    %1503 = vdwg.mxu0
    %1504 = vmatprep.subr.mxu0 0.0
    %1505 = vmatpush1.msra.mxu0 %v1160
    %1506 = vmatprep.subr.mxu0 0.0
    %1507 = vmatpush1.msra.mxu0 %v1159
    %1508 = vmatprep.subr.mxu0 0.0
    %1509 = vmatpush1.msra.mxu0 %v1158
    %1510 = vmatprep.subr.mxu0 0.0
    %1511 = vmatpush1.msra.mxu0 %v1157
    %1512 = vmatprep.subr.mxu0 0.0
    %1513 = vmatpush1.msra.mxu0 %v1156
    %1514 = vmatprep.subr.mxu0 0.0
    %1515 = vmatpush1.msra.mxu0 %v1155
    %1516 = vmatprep.subr.mxu0 0.0
    %1517 = vmatpush1.msra.mxu0 %v1154
    %1518 = vmatprep.subr.mxu0 0.0
    %1519 = vmatpush1.msra.mxu0 %v1153
    %1520 = vmatprep.subr.mxu0 0.0
    %1521 = vmatpush1.msra.mxu0 %v1152
    %1522 = vmatprep.subr.mxu0 0.0
    %1523 = vmatpush1.msra.mxu0 %v1151
    %1524 = vmatprep.subr.mxu0 0.0
    %1525 = vmatpush1.msra.mxu0 %v1150
    %1526 = vmatprep.subr.mxu0 0.0
    %1527 = vmatpush1.msra.mxu0 %v1149
    %1528 = vmatprep.subr.mxu0 0.0
    %1529 = vmatpush1.msra.mxu0 %v1148
    %1530 = vmatprep.subr.mxu0 0.0
    %1531 = vmatpush1.msra.mxu0 %v1147
    %1532 = vmatprep.subr.mxu0 0.0
    %1533 = vmatpush1.msra.mxu0 %v1146
    %1534 = vmatprep.subr.mxu0 0.0
    %1535 = vmatpush1.msra.mxu0 %v1145
    %1536 = vmatprep.subr.mxu0 0.0
    %1537 = vmatpush2.msra.mxu0 %v1176
    %1538 = vmatprep.subr.mxu0 0.0
    %1539 = vmatpush2.msra.mxu0 %v1175
    %1540 = vmatprep.subr.mxu0 0.0
    %1541 = vmatpush2.msra.mxu0 %v1174
    %1542 = vmatprep.subr.mxu0 0.0
    %1543 = vmatpush2.msra.mxu0 %v1173
    %1544 = vmatprep.subr.mxu0 0.0
    %1545 = vmatpush2.msra.mxu0 %v1172
    %1546 = vmatprep.subr.mxu0 0.0
    %1547 = vmatpush2.msra.mxu0 %v1171
    %1548 = vmatprep.subr.mxu0 0.0
    %1549 = vmatpush2.msra.mxu0 %v1170
    %1550 = vmatprep.subr.mxu0 0.0
    %1551 = vmatpush2.msra.mxu0 %v1169
    %1552 = vmatprep.subr.mxu0 0.0
    %1553 = vmatpush2.msra.mxu0 %v1168
    %1554 = vmatprep.subr.mxu0 0.0
    %1555 = vmatpush2.msra.mxu0 %v1167
    %1556 = vmatprep.subr.mxu0 0.0
    %1557 = vmatpush2.msra.mxu0 %v1166
    %1558 = vmatprep.subr.mxu0 0.0
    %1559 = vmatpush2.msra.mxu0 %v1165
    %1560 = vmatprep.subr.mxu0 0.0
    %1561 = vmatpush2.msra.mxu0 %v1164
    %1562 = vmatprep.subr.mxu0 0.0
    %1563 = vmatpush2.msra.mxu0 %v1163
    %1564 = vmatprep.subr.mxu0 0.0
    %1565 = vmatpush2.msra.mxu0 %v1162
    %1566 = vmatprep.subr.mxu0 0.0
    %1567 = vmatpush2.msra.mxu0 %v1161
    %1568 = vmatprep.mubr.f32.mxu0 %v1013
    %1569 = vmatmul.mubr.f32.gmra.mxu0 %v1012
    %v1570 = vpop.f32.mrf.mxu0
    %v1571 = vadd.f32 %v1501, %v1570
    %v1572 = vpop.f32.mrf.mxu0
    %1573 = vdwg.mxu0
    %1574 = vmatprep.subr.mxu0 0.0
    %1575 = vmatpush1.msra.mxu0 %v1192
    %1576 = vmatprep.subr.mxu0 0.0
    %1577 = vmatpush1.msra.mxu0 %v1191
    %1578 = vmatprep.subr.mxu0 0.0
    %1579 = vmatpush1.msra.mxu0 %v1190
    %1580 = vmatprep.subr.mxu0 0.0
    %1581 = vmatpush1.msra.mxu0 %v1189
    %1582 = vmatprep.subr.mxu0 0.0
    %1583 = vmatpush1.msra.mxu0 %v1188
    %1584 = vmatprep.subr.mxu0 0.0
    %1585 = vmatpush1.msra.mxu0 %v1187
    %1586 = vmatprep.subr.mxu0 0.0
    %1587 = vmatpush1.msra.mxu0 %v1186
    %1588 = vmatprep.subr.mxu0 0.0
    %1589 = vmatpush1.msra.mxu0 %v1185
    %1590 = vmatprep.subr.mxu0 0.0
    %1591 = vmatpush1.msra.mxu0 %v1184
    %1592 = vmatprep.subr.mxu0 0.0
    %1593 = vmatpush1.msra.mxu0 %v1183
    %1594 = vmatprep.subr.mxu0 0.0
    %1595 = vmatpush1.msra.mxu0 %v1182
    %1596 = vmatprep.subr.mxu0 0.0
    %1597 = vmatpush1.msra.mxu0 %v1181
    %1598 = vmatprep.subr.mxu0 0.0
    %1599 = vmatpush1.msra.mxu0 %v1180
    %1600 = vmatprep.subr.mxu0 0.0
    %1601 = vmatpush1.msra.mxu0 %v1179
    %1602 = vmatprep.subr.mxu0 0.0
    %1603 = vmatpush1.msra.mxu0 %v1178
    %1604 = vmatprep.subr.mxu0 0.0
    %1605 = vmatpush1.msra.mxu0 %v1177
    %1606 = vmatprep.subr.mxu0 0.0
    %1607 = vmatpush2.msra.mxu0 %v1208
    %1608 = vmatprep.subr.mxu0 0.0
    %1609 = vmatpush2.msra.mxu0 %v1207
    %1610 = vmatprep.subr.mxu0 0.0
    %1611 = vmatpush2.msra.mxu0 %v1206
    %1612 = vmatprep.subr.mxu0 0.0
    %1613 = vmatpush2.msra.mxu0 %v1205
    %1614 = vmatprep.subr.mxu0 0.0
    %1615 = vmatpush2.msra.mxu0 %v1204
    %1616 = vmatprep.subr.mxu0 0.0
    %1617 = vmatpush2.msra.mxu0 %v1203
    %1618 = vmatprep.subr.mxu0 0.0
    %1619 = vmatpush2.msra.mxu0 %v1202
    %1620 = vmatprep.subr.mxu0 0.0
    %1621 = vmatpush2.msra.mxu0 %v1201
    %1622 = vmatprep.subr.mxu0 0.0
    %1623 = vmatpush2.msra.mxu0 %v1200
    %1624 = vmatprep.subr.mxu0 0.0
    %1625 = vmatpush2.msra.mxu0 %v1199
    %1626 = vmatprep.subr.mxu0 0.0
    %1627 = vmatpush2.msra.mxu0 %v1198
    %1628 = vmatprep.subr.mxu0 0.0
    %1629 = vmatpush2.msra.mxu0 %v1197
    %1630 = vmatprep.subr.mxu0 0.0
    %1631 = vmatpush2.msra.mxu0 %v1196
    %1632 = vmatprep.subr.mxu0 0.0
    %1633 = vmatpush2.msra.mxu0 %v1195
    %1634 = vmatprep.subr.mxu0 0.0
    %1635 = vmatpush2.msra.mxu0 %v1194
    %1636 = vmatprep.subr.mxu0 0.0
    %1637 = vmatpush2.msra.mxu0 %v1193
    %1638 = vmatprep.mubr.f32.mxu0 %v1015
    %1639 = vmatmul.mubr.f32.gmra.mxu0 %v1014
    %v1640 = vpop.f32.mrf.mxu0
    %v1641 = vadd.f32 %v1571, %v1640
    %v1642 = vpop.f32.mrf.mxu0
    %1643 = vdwg.mxu0
    %1644 = vmatprep.subr.mxu0 0.0
    %1645 = vmatpush1.msra.mxu0 0.0
    %1646 = vmatprep.subr.mxu0 0.0
    %1647 = vmatpush1.msra.mxu0 0.0
    %1648 = vmatprep.subr.mxu0 0.0
    %1649 = vmatpush1.msra.mxu0 0.0
    %1650 = vmatprep.subr.mxu0 0.0
    %1651 = vmatpush1.msra.mxu0 0.0
    %1652 = vmatprep.subr.mxu0 0.0
    %1653 = vmatpush1.msra.mxu0 0.0
    %1654 = vmatprep.subr.mxu0 0.0
    %1655 = vmatpush1.msra.mxu0 0.0
    %1656 = vmatprep.subr.mxu0 0.0
    %1657 = vmatpush1.msra.mxu0 0.0
    %1658 = vmatprep.subr.mxu0 0.0
    %1659 = vmatpush1.msra.mxu0 0.0
    %1660 = vmatprep.subr.mxu0 0.0
    %1661 = vmatpush1.msra.mxu0 0.0
    %1662 = vmatprep.subr.mxu0 0.0
    %1663 = vmatpush1.msra.mxu0 0.0
    %1664 = vmatprep.subr.mxu0 0.0
    %1665 = vmatpush1.msra.mxu0 0.0
    %1666 = vmatprep.subr.mxu0 0.0
    %1667 = vmatpush1.msra.mxu0 0.0
    %1668 = vmatprep.subr.mxu0 0.0
    %1669 = vmatpush1.msra.mxu0 %v1212
    %1670 = vmatprep.subr.mxu0 0.0
    %1671 = vmatpush1.msra.mxu0 %v1211
    %1672 = vmatprep.subr.mxu0 0.0
    %1673 = vmatpush1.msra.mxu0 %v1210
    %1674 = vmatprep.subr.mxu0 0.0
    %1675 = vmatpush1.msra.mxu0 %v1209
    %1676 = vmatprep.subr.mxu0 0.0
    %1677 = vmatpush2.msra.mxu0 0.0
    %1678 = vmatprep.subr.mxu0 0.0
    %1679 = vmatpush2.msra.mxu0 0.0
    %1680 = vmatprep.subr.mxu0 0.0
    %1681 = vmatpush2.msra.mxu0 0.0
    %1682 = vmatprep.subr.mxu0 0.0
    %1683 = vmatpush2.msra.mxu0 0.0
    %1684 = vmatprep.subr.mxu0 0.0
    %1685 = vmatpush2.msra.mxu0 0.0
    %1686 = vmatprep.subr.mxu0 0.0
    %1687 = vmatpush2.msra.mxu0 0.0
    %1688 = vmatprep.subr.mxu0 0.0
    %1689 = vmatpush2.msra.mxu0 0.0
    %1690 = vmatprep.subr.mxu0 0.0
    %1691 = vmatpush2.msra.mxu0 0.0
    %1692 = vmatprep.subr.mxu0 0.0
    %1693 = vmatpush2.msra.mxu0 0.0
    %1694 = vmatprep.subr.mxu0 0.0
    %1695 = vmatpush2.msra.mxu0 0.0
    %1696 = vmatprep.subr.mxu0 0.0
    %1697 = vmatpush2.msra.mxu0 0.0
    %1698 = vmatprep.subr.mxu0 0.0
    %1699 = vmatpush2.msra.mxu0 0.0
    %1700 = vmatprep.subr.mxu0 0.0
    %1701 = vmatpush2.msra.mxu0 0.0
    %1702 = vmatprep.subr.mxu0 0.0
    %1703 = vmatpush2.msra.mxu0 0.0
    %1704 = vmatprep.subr.mxu0 0.0
    %1705 = vmatpush2.msra.mxu0 0.0
    %1706 = vmatprep.subr.mxu0 0.0
    %1707 = vmatpush2.msra.mxu0 0.0
    %1708 = vmatprep.mubr.f32.mxu0 0.0
    %1709 = vmatmul.mubr.f32.gmra.mxu0 %v1222
    %v1710 = vpop.f32.mrf.mxu0
    %v1711 = vadd.f32 %v1641, %v1710
    %v1712 = vpop.f32.mrf.mxu0
    %1713 = vdwg.mxu0
    %v1715 = vrot.slane %v1711, 2
    %v1717 = vsub.f32 %v1711, %v1715
    %v1718 = vmul.f32 %v1717, %v1717
    %vm1719 = vcmask 254976
    %v1720 = vsel %vm1719, %v1718, 0.0
    %1721 = vadd.xlane.f32.xlu0 %v1720
    %v1722 = vpop.xlane.xlu0 %1721
    %v1723 = vrot.slane %v1711, 4
    %v1725 = vsub.f32 %v1711, %v1723
    %v1726 = vmul.f32 %v1725, %v1725
    %v1727 = vsel %vm1719, %v1726, 0.0
    %1728 = vadd.xlane.f32.xlu0 %v1727
    %v1729 = vpop.xlane.xlu0 %1728
    %v1730 = vsub.f32 %v1722, %v1729
    %v1731 = vadd.f32 %v1730, 0.5
    %v1732 = vmax.f32 %v1731, 0.0
    %vm1733 = vcmask 1041408
    %v1734 = vsel %vm1733, %v1732, 0.0
    %v1735 = vrot.slane %v1734, 4
    %v1736 = vadd.f32 %v1734, %v1735
    %v1737 = vrot.slane %v1736, 2
    %v1738 = vadd.f32 %v1736, %v1737
    %v1739 = vrot.slane %v1738, 1
    %v1740 = vadd.f32 %v1738, %v1739
    %v1741 = vmul.f32 %v1740, 0.5
    %vm1742 = vcmask 0
    %1743 = vst.msk [vmem:[#allocation2] sm:$0x1] %vm1742, %v1741
    // Predicated region
    $region22: #{triplet_forward.1} parent=1 // pred_check
      _
    $region23: #{triplet_forward.1} parent=1 // pred_check_branch
      %1745 = sbr.rel (0) target = $region25
    $region24: #{triplet_forward.1} parent=1 // pred_region
      %s1747 = ssub.s32 16, 16
      %1748 = vsyncadd [#allocation3], %s1747
      %s1750 = sshll.u32 [#allocation2], 4
      %s1751 = int_to_ptr.vmem [resolvable:$true] %s1750
      %1753 = dma.vmem_to_hbm [thread:$0]  %s1751, 16, %s5, [#allocation3]
    $region25: #{triplet_forward.1} parent=1 // pred_fallthru
      _
    // Predicated region
    $region26: #{triplet_forward.1} parent=1 // pred_check
      _
    $region27: #{triplet_forward.1} parent=1 // pred_check_branch
      %1755 = sbr.rel (0) target = $region29
    $region28: #{triplet_forward.1} parent=1 // pred_region
      %1756 = dma.done [#allocation3], 16
    $region29: #{triplet_forward.1} parent=1 // pred_fallthru
      _
    %1757 = vsyncpa [#allocation3], 1

</llo_original>
